<compile_context>
chip_gen: v7x
topology: tpu7x:2x2x1
jax: 0.10.0
libtpu: 0.0.40
codegen_flags: <defaults>
</compile_context>

<pallas_src>
import functools

import jax
import jax.numpy as jnp
import numpy as np
from jax.experimental import pallas as pl
from jax.experimental.pallas import tpu as pltpu


# ----------------------------- hardware queries ----------------------------- #

@functools.lru_cache(maxsize=1)
def _vmem_capacity_bytes():
    """Physical VMEM per core; conservative 64 MiB (v7x-class) fallback if query fails."""
    try:
        info = pltpu.get_tpu_info()
        cap = int(getattr(info, "vmem_capacity_bytes", 0) or 0)
        if cap > (8 << 20):
            return cap
    except Exception:
        pass
    return 64 << 20


@functools.lru_cache(maxsize=1)
def _default_targets():
    """(tm, tk, bh_cap) tile targets per generation (re-sweep when new parts land)."""
    cap = _vmem_capacity_bytes()
    if cap <= (80 << 20):
        return 256, 256, 4      # v7x-class: 64 MiB VMEM, 2 TCs -> smaller working set
    return 256, 1024, 8         # v5e / v6e: 128 MiB VMEM -> longer K tiles, more heads


# ----------------------------- Pallas kernels ------------------------------ #

def _raw_matmul_kernel(a_ref, b_ref, o_ref, acc_ref, bcache_ref=None):
    # out[b, m, n] = sum_k A[b, m, k] * B[b, k, n]     (mode == 'raw')
    m = pl.program_id(1)
    k = pl.program_id(2)

    @pl.when(k == 0)
    def _():
        acc_ref[...] = jnp.zeros_like(acc_ref)

    if bcache_ref is None:
        # Single M tile: caching B would be pure overhead.
        b_blk = b_ref[...].astype(jnp.bfloat16)
    else:
        # B is streamed from HBM only at m == 0 and kept (bf16) in VMEM for all later
        # M tiles of this head-block; the B BlockSpec parks on the last K block for
        # m > 0 so no re-DMA is issued at the M boundary.
        @pl.when(m == 0)
        def _():
            bcache_ref[k] = b_ref[...].astype(jnp.bfloat16)

        b_blk = bcache_ref[k]

    acc_ref[...] += jnp.einsum('bmk,bkn->bmn',
                               a_ref[...].astype(jnp.bfloat16), b_blk,
                               preferred_element_type=jnp.float32)

    @pl.when(k == pl.num_programs(2) - 1)
    def _():
        o_ref[...] = acc_ref[...].astype(o_ref.dtype)


def _quant_matmul_kernel(a_ref, b_ref, bint_ref, o_ref, acc_ref, bsim_ref, *,
                         split, a_interval, a_qmax, b_qmax):
    # mode == 'quant_forward':  out = quant_A(A) @ quant_B(B)
    m = pl.program_id(1)
    k = pl.program_id(2)

    # ---- B quantization, hoisted out of the M loop (once per head-block per K tile). --
    # True divide by the interval map runs on the EUP (idle slot; the VALU binds) and
    # matches the torch reference exactly, including inf/nan for zero intervals.
    @pl.when(m == 0)
    def _():
        bv = b_ref[...].astype(jnp.float32)
        q = jnp.clip(jnp.round(bv / bint_ref[...]), -b_qmax, b_qmax - 1.0)
        bsim_ref[k] = (q * bint_ref[...]).astype(jnp.bfloat16)

    @pl.when(k == 0)
    def _():
        acc_ref[...] = jnp.zeros_like(acc_ref)

    # ---- A quantization: two-range post-softmax scheme, trimmed for the VALU. ----
    # A is post-softmax (values in [0, 1]) and A_interval >= split / (A_qmax - 1), so the
    # reference's outer clips and the lower bound of clip(A, 0, split) are no-ops.
    av = a_ref[...].astype(jnp.float32)
    x_high = (jnp.round(jnp.clip(av, split, 1.0) * (a_qmax - 1.0))
              * (1.0 / (a_qmax - 1.0)))
    x_low = jnp.round(jnp.minimum(av, split) * (1.0 / a_interval)) * a_interval
    a_sim = (x_high + x_low).astype(jnp.bfloat16)

    acc_ref[...] += jnp.einsum('bmk,bkn->bmn', a_sim, bsim_ref[k],
                               preferred_element_type=jnp.float32)

    @pl.when(k == pl.num_programs(2) - 1)
    def _():
        o_ref[...] = acc_ref[...].astype(o_ref.dtype)


# ------------------------------ pallas_call glue ---------------------------- #

def _round_up(x, m):
    return ((x + m - 1) // m) * m


def _sublane_granule(dtype):
    # (8, 128) layout granule scales with packing: 8 sublanes for 4-byte dtypes,
    # 16 for 2-byte (bf16), 32 for 1-byte.
    return max(8, 32 // np.dtype(dtype).itemsize)


def _choose_tile(dim, requested, target, granule):
    """Tile size (multiple of `granule`) and the padded dim (multiple of the tile)."""
    t = target if requested is None else int(requested)
    t = min(t, _round_up(dim, granule))
    t = _round_up(max(t, granule), granule)
    return t, _round_up(dim, t)


def _pad_axis(x, axis, target, value=0.0):
    pad = target - x.shape[axis]
    if pad <= 0:
        return x
    widths = [(0, 0)] * x.ndim
    widths[axis] = (0, pad)
    return jnp.pad(x, widths, constant_values=value)


def _pick_bh_block(heads, bh_total, cap):
    """Largest divisor of `heads` <= cap; also keeps grid dim 0 >= 2 when possible so the
    'parallel' head axis can actually shard across TensorCores (megacore / v7x 2 TCs)."""
    cap = max(1, min(cap, heads))
    if bh_total >= 2:
        cap = max(1, min(cap, bh_total // 2))
    for c in range(cap, 0, -1):
        if heads % c == 0:
            return c
    return 1


def _compiler_params(vmem_est_bytes):
    cap = _vmem_capacity_bytes()
    want = max(int(1.5 * vmem_est_bytes), 32 << 20)
    return pltpu.CompilerParams(
        # The cached-B VMEM scratch relies on M (and K) being traversed sequentially
        # within a head-block: keep those axes "arbitrary"; only the head axis is
        # "parallel".
        dimension_semantics=("parallel", "arbitrary", "arbitrary"),
        vmem_limit_bytes=min(want, int(0.85 * cap)),
    )


def _call_raw(A, B, heads, *, tile_m=None, tile_k=None, bh_cap=None):
    BH, M, K = A.shape
    N = B.shape[-1]
    tm_t, tk_t, bh_t = _default_targets()
    tm, Mp = _choose_tile(M, tile_m, tm_t, _sublane_granule(A.dtype))
    tk, Kp = _choose_tile(K, tile_k, tk_t, 128)
    bh_block = _pick_bh_block(heads, BH, bh_t if bh_cap is None else bh_cap)
    assert BH % bh_block == 0
    n_m, n_k = Mp // tm, Kp // tk

    A = _pad_axis(_pad_axis(A, 1, Mp), 2, Kp)   # zero pad: contributes 0 to the matmul
    B = _pad_axis(B, 1, Kp)

    cache_b = n_m > 1
    scratch = [pltpu.VMEM((bh_block, tm, N), jnp.float32)]           # f32 accumulator
    if cache_b:
        scratch.append(pltpu.VMEM((n_k, bh_block, tk, N), jnp.bfloat16))  # cached B

    def _b_map(i, m, k):
        if not cache_b:
            return (i, k, 0)
        # B is only read at m == 0; for m > 0 park on the last K block (no re-DMA).
        return (i, jnp.where(m == 0, k, n_k - 1), 0)

    est = (2 * bh_block * tm * tk * A.dtype.itemsize
           + 2 * bh_block * tk * N * B.dtype.itemsize
           + 3 * bh_block * tm * N * 4
           + (n_k * bh_block * tk * N * 2 if cache_b else 0))

    out = pl.pallas_call(
        _raw_matmul_kernel,
        out_shape=jax.ShapeDtypeStruct((BH, Mp, N), jnp.float32),
        grid=(BH // bh_block, n_m, n_k),
        in_specs=[
            pl.BlockSpec((bh_block, tm, tk), lambda i, m, k: (i, m, k)),
            pl.BlockSpec((bh_block, tk, N), _b_map),
        ],
        out_specs=pl.BlockSpec((bh_block, tm, N), lambda i, m, k: (i, m, 0)),
        scratch_shapes=scratch,
        compiler_params=_compiler_params(est),
    )(A, B)
    return out[:, :M, :]


def _call_quant(A, B, Bint, heads, *, split, a_interval, a_qmax, b_qmax,
                tile_m=None, tile_k=None, bh_cap=None):
    BH, M, K = A.shape
    N = B.shape[-1]
    tm_t, tk_t, bh_t = _default_targets()
    tm, Mp = _choose_tile(M, tile_m, tm_t, _sublane_granule(A.dtype))
    tk, Kp = _choose_tile(K, tile_k, tk_t, 128)
    bh_block = _pick_bh_block(heads, BH, bh_t if bh_cap is None else bh_cap)
    assert BH % bh_block == 0 and heads % bh_block == 0
    n_m, n_k = Mp // tm, Kp // tk
    n_hb = heads // bh_block    # head-blocks in the batch-deduplicated interval map

    # Zero-pad A/B along K (padded rows quantize to exactly 0 in B, so they contribute
    # nothing); pad the interval map with ones to avoid 0/0 NaNs; extra M rows are
    # cropped from the output below.
    A = _pad_axis(_pad_axis(A, 1, Mp), 2, Kp)
    B = _pad_axis(B, 1, Kp)
    Bint = _pad_axis(Bint, 1, Kp, value=1.0)

    kernel = functools.partial(
        _quant_matmul_kernel,
        split=float(split), a_interval=float(a_interval),
        a_qmax=float(a_qmax), b_qmax=float(b_qmax))

    # B / Bint are consumed only at m == 0; for m > 0 their block index parks on the
    # last K block so no re-DMA is issued at M-tile boundaries.
    def _b_map(i, m, k):
        return (i, jnp.where(m == 0, k, n_k - 1), 0)

    def _bint_map(i, m, k):
        # Assumes heads is the innermost leading axis of A/B (B_interval's group axis).
        return (i % n_hb, jnp.where(m == 0, k, n_k - 1), 0)

    est = (2 * bh_block * tm * tk * A.dtype.itemsize
           + 2 * bh_block * tk * N * (B.dtype.itemsize + Bint.dtype.itemsize)
           + 3 * bh_block * tm * N * 4
           + n_k * bh_block * tk * N * 2)

    out = pl.pallas_call(
        kernel,
        out_shape=jax.ShapeDtypeStruct((BH, Mp, N), jnp.float32),
        grid=(BH // bh_block, n_m, n_k),
        in_specs=[
            pl.BlockSpec((bh_block, tm, tk), lambda i, m, k: (i, m, k)),
            pl.BlockSpec((bh_block, tk, N), _b_map),
            pl.BlockSpec((bh_block, tk, N), _bint_map),
        ],
        out_specs=pl.BlockSpec((bh_block, tm, N), lambda i, m, k: (i, m, 0)),
        scratch_shapes=[
            pltpu.VMEM((bh_block, tm, N), jnp.float32),          # f32 accumulator
            pltpu.VMEM((n_k, bh_block, tk, N), jnp.bfloat16),    # cached quantized B
        ],
        compiler_params=_compiler_params(est),
    )(A, B, Bint)
    return out[:, :M, :]


# ------------------------- Module-equivalent wrapper ------------------------ #

class InferQuantMatMulPost:
    """JAX/Pallas port of tinysam InferQuantMatMulPost (forward pass only)."""

    def __init__(self, A_bit=8, B_bit=8, mode='raw',
                 tile_m=None, tile_k=None, bh_cap=None):
        self.A_bit = A_bit
        self.B_bit = B_bit
        self.A_qmax = 2 ** (A_bit - 1)
        self.B_qmax = 2 ** (B_bit - 1)
        self.mode = mode
        # Tiling knobs (None -> generation-aware defaults from _default_targets()).
        self.tile_m = tile_m
        self.tile_k = tile_k
        self.bh_cap = bh_cap

    def get_parameter(self, A_interval, B_interval,
                      n_G_A, n_V_A, n_H_A, n_G_B, n_V_B, n_H_B,
                      crb_groups_A, crb_groups_B, crb_rows_A, crb_rows_B,
                      crb_cols_A, crb_cols_B,
                      pad_groups_A, pad_groups_B, pad_rows_A, pad_rows_B,
                      pad_cols_A, pad_cols_B, split):
        self.A_interval = float(A_interval)
        self.B_interval = jnp.asarray(B_interval, jnp.float32)  # (1,nG,1,nV,1,nH,1)
        self.n_G_B, self.n_V_B, self.n_H_B = n_G_B, n_V_B, n_H_B
        self.crb_groups_B, self.crb_rows_B, self.crb_cols_B = (
            crb_groups_B, crb_rows_B, crb_cols_B)
        self.pad_groups_B, self.pad_rows_B, self.pad_cols_B = (
            pad_groups_B, pad_rows_B, pad_cols_B)
        self.split = float(split)
        # A-side group buffers are stored by the torch module but unused by its forward.

    def _b_interval_map(self, B_shape):
        """Per-element B interval map, shape (H, K, N) -- shared across the batch
        dimension (no per-batch*head replication in HBM)."""
        # TODO(synk): stream this map as bf16 (halves its HBM bytes) once the
        # level-shift-at-rounding-boundary delta is validated vs. the torch reference.
        G, R, C = B_shape[-3], B_shape[-2], B_shape[-1]
        full = jnp.broadcast_to(
            self.B_interval,
            (1, self.n_G_B, self.crb_groups_B, self.n_V_B, self.crb_rows_B,
             self.n_H_B, self.crb_cols_B))
        full = full.reshape(self.n_G_B * self.crb_groups_B,
                            self.n_V_B * self.crb_rows_B,
                            self.n_H_B * self.crb_cols_B)
        # Drop the pad region: quantize-then-crop == crop-then-quantize (elementwise).
        return full[:G, :R, :C]

    def __call__(self, A, B):
        *lead, M, K = A.shape
        N = B.shape[-1]
        BH = int(np.prod(lead)) if lead else 1
        heads = B.shape[-3] if B.ndim >= 3 else 1
        A2 = A.reshape(BH, M, K)     # native dtype -- no wrapper-side f32 cast pass
        B2 = B.reshape(BH, K, N)
        if self.mode == 'raw':
            out = _call_raw(A2, B2, heads, tile_m=self.tile_m,
                            tile_k=self.tile_k, bh_cap=self.bh_cap)
        elif self.mode == 'quant_forward':
            Bint = self._b_interval_map(B.shape)
            out = _call_quant(A2, B2, Bint, heads,
                              split=self.split, a_interval=self.A_interval,
                              a_qmax=float(self.A_qmax), b_qmax=float(self.B_qmax),
                              tile_m=self.tile_m, tile_k=self.tile_k,
                              bh_cap=self.bh_cap)
        else:
            raise NotImplementedError
        return out.reshape(*lead, M, N)


# ------------------------------- Reference ---------------------------------- #

def _ref_quant_forward(A, B, mod: InferQuantMatMulPost):
    """Pure-JAX, torch-faithful reference (f32 math, full clip chain, true divide)."""
    a_qmax, b_qmax = mod.A_qmax, mod.B_qmax
    x_high = jnp.clip(jnp.round(jnp.clip(A, mod.split, 1.0) * (a_qmax - 1)),
                      0, a_qmax - 1) / (a_qmax - 1)
    x_low = jnp.clip(jnp.round(jnp.clip(A, 0.0, mod.split) / mod.A_interval),
                     0, a_qmax - 1) * mod.A_interval
    A_sim = x_high + x_low
    Bint = mod._b_interval_map(B.shape)
    B_sim = jnp.clip(jnp.round(B / Bint), -b_qmax, b_qmax - 1) * Bint
    return A_sim @ B_sim


# --------------------------------- Main -------------------------------------- #

if __name__ == "__main__":
    key = jax.random.PRNGKey(0)
    k1, k2 = jax.random.split(key)

    # Small attention-like shapes (batch=2, heads=4, q_len=32, kv_len=256, head_dim=32).
    Bsz, H, M, K, N = 2, 4, 32, 256, 32

    # A is a post-softmax attention matrix (values in [0, 1], rows sum to 1).
    logits = jax.random.normal(k1, (Bsz, H, M, K), jnp.float32)
    A = jax.nn.softmax(logits, axis=-1)
    B = 0.5 * jax.random.normal(k2, (Bsz, H, K, N), jnp.float32)

    # Deterministic quantization parameters (synthetic, shapes per get_parameter).
    A_bit, B_bit = 8, 8
    split = 0.01
    A_interval = split / (2 ** (A_bit - 1) - 1)
    n_G_B, n_V_B, n_H_B = 1, 2, 2
    crb_groups_B, crb_rows_B, crb_cols_B = H, K // n_V_B, N // n_H_B
    B_interval = (0.02 + 0.01 * jnp.arange(n_G_B * n_V_B * n_H_B, dtype=jnp.float32)
                  ).reshape(1, n_G_B, 1, n_V_B, 1, n_H_B, 1)

    # Small tiles force a multi-tile grid so the accumulator, cached-B (m>0) and
    # collapsed-index paths are all exercised even at toy sizes; leave tile_m/tile_k=None
    # for the production (generation-aware) defaults.
    mod = InferQuantMatMulPost(A_bit=A_bit, B_bit=B_bit, mode='quant_forward',
                               tile_m=16, tile_k=128)
    mod.get_parameter(
        A_interval, B_interval,
        1, 1, 1, n_G_B, n_V_B, n_H_B,
        1, crb_groups_B, M, crb_rows_B, K, crb_cols_B,
        0, 0, 0, 0, 0, 0,   # pads are zero for these shapes
        split)

    # quant_forward path (quantize A & B inside the kernel, bf16 MXU matmul, f32 acc).
    out_q = jax.block_until_ready(mod(A, B))
    ref_q = _ref_quant_forward(A, B, mod)
    assert out_q.shape == (Bsz, H, M, N)
    # Tolerance reflects the bf16 MXU operands (values are 8-bit-quantized levels).
    np.testing.assert_allclose(np.asarray(out_q), np.asarray(ref_q),
                               rtol=2e-2, atol=2e-2)

    # raw path (plain batched A @ B, bf16 operands, f32 accumulation, cached B).
    mod.mode = 'raw'
    out_raw = jax.block_until_ready(mod(A, B))
    np.testing.assert_allclose(np.asarray(out_raw), np.asarray(A @ B),
                               rtol=2e-2, atol=2e-2)

    print("KERNEL_OK")
</pallas_src>

<mosaic_0001>
module attributes {stable_mosaic.version = 11 : i64} {
  func.func @_quant_matmul_kernel(%arg0: i32, %arg1: i32, %arg2: i32, %arg3: memref<4x16x128xf32, #tpu.memory_space<vmem>>, %arg4: memref<4x128x32xf32, #tpu.memory_space<vmem>>, %arg5: memref<4x128x32xf32, #tpu.memory_space<vmem>>, %arg6: memref<4x16x32xf32, #tpu.memory_space<vmem>>, %arg7: memref<4x16x32xf32, #tpu.memory_space<vmem>>, %arg8: memref<2x4x128x32xbf16, #tpu.memory_space<vmem>>) attributes {dimension_semantics = [#tpu.dimension_semantics<parallel>, #tpu.dimension_semantics<arbitrary>, #tpu.dimension_semantics<arbitrary>], iteration_bounds = array<i64: 2, 2, 2>, scalar_prefetch = 0 : i64, scratch_operands = 2 : i64, tpu.core_type = #tpu.core_type<tc>, window_params = [{transform_indices = @transform_0, window_bounds = array<i64: 4, 16, 128>}, {transform_indices = @transform_1, window_bounds = array<i64: 4, 128, 32>}, {transform_indices = @transform_2, window_bounds = array<i64: 4, 128, 32>}, {transform_indices = @transform_3, window_bounds = array<i64: 4, 16, 32>}]} {
    %c0_i32 = arith.constant 0 : i32
    %0 = arith.cmpi eq, %arg1, %c0_i32 : i32
    %1 = arith.extui %0 : i1 to i32
    %c0_i32_0 = arith.constant 0 : i32
    %2 = arith.cmpi ne, %1, %c0_i32_0 : i32
    scf.if %2 {
      %c0_22 = arith.constant 0 : index
      %c0_23 = arith.constant 0 : index
      %c0_24 = arith.constant 0 : index
      %35 = vector.load %arg4[%c0_22, %c0_23, %c0_24] : memref<4x128x32xf32, #tpu.memory_space<vmem>>, vector<4x128x32xf32>
      %c0_25 = arith.constant 0 : index
      %c0_26 = arith.constant 0 : index
      %c0_27 = arith.constant 0 : index
      %36 = vector.load %arg5[%c0_25, %c0_26, %c0_27] : memref<4x128x32xf32, #tpu.memory_space<vmem>>, vector<4x128x32xf32>
      %37 = arith.divf %35, %36 : vector<4x128x32xf32>
      %38 = math.roundeven %37 : vector<4x128x32xf32>
      %cst_28 = arith.constant -1.280000e+02 : f32
      %cst_29 = arith.constant 1.270000e+02 : f32
      %39 = vector.broadcast %cst_28 : f32 to vector<4x128x32xf32>
      %40 = arith.maximumf %39, %38 : vector<4x128x32xf32>
      %41 = vector.broadcast %cst_29 : f32 to vector<4x128x32xf32>
      %42 = arith.minimumf %41, %40 : vector<4x128x32xf32>
      %c0_30 = arith.constant 0 : index
      %c0_31 = arith.constant 0 : index
      %c0_32 = arith.constant 0 : index
      %43 = vector.load %arg5[%c0_30, %c0_31, %c0_32] : memref<4x128x32xf32, #tpu.memory_space<vmem>>, vector<4x128x32xf32>
      %44 = arith.mulf %42, %43 : vector<4x128x32xf32>
      %45 = arith.truncf %44 : vector<4x128x32xf32> to vector<4x128x32xbf16>
      %46 = arith.index_cast %arg2 : i32 to index
      %c0_33 = arith.constant 0 : index
      %c0_34 = arith.constant 0 : index
      %c0_35 = arith.constant 0 : index
      %47 = vector.load %arg8[%46, %c0_33, %c0_34, %c0_35] : memref<2x4x128x32xbf16, #tpu.memory_space<vmem>>, vector<1x4x128x32xbf16>
      %48 = vector.shape_cast %47 : vector<1x4x128x32xbf16> to vector<4x128x32xbf16>
      %49 = vector.shape_cast %45 : vector<4x128x32xbf16> to vector<1x4x128x32xbf16>
      tpu.vector_store %arg8[%46, %c0_33, %c0_34, %c0_35], %49 {strides = array<i32>} : memref<2x4x128x32xbf16, #tpu.memory_space<vmem>>, vector<1x4x128x32xbf16>,
    } else {
    }
    %c0_i32_1 = arith.constant 0 : i32
    %3 = arith.cmpi eq, %arg2, %c0_i32_1 : i32
    %4 = arith.extui %3 : i1 to i32
    %c0_i32_2 = arith.constant 0 : i32
    %5 = arith.cmpi ne, %4, %c0_i32_2 : i32
    scf.if %5 {
      %cst_22 = arith.constant 0.000000e+00 : f32
      %35 = vector.broadcast %cst_22 : f32 to vector<4x16x32xf32>
      %c0_23 = arith.constant 0 : index
      %c0_24 = arith.constant 0 : index
      %c0_25 = arith.constant 0 : index
      %36 = vector.load %arg7[%c0_23, %c0_24, %c0_25] : memref<4x16x32xf32, #tpu.memory_space<vmem>>, vector<4x16x32xf32>
      tpu.vector_store %arg7[%c0_23, %c0_24, %c0_25], %35 {strides = array<i32>} : memref<4x16x32xf32, #tpu.memory_space<vmem>>, vector<4x16x32xf32>,
    } else {
    }
    %c0 = arith.constant 0 : index
    %c0_3 = arith.constant 0 : index
    %c0_4 = arith.constant 0 : index
    %6 = vector.load %arg3[%c0, %c0_3, %c0_4] : memref<4x16x128xf32, #tpu.memory_space<vmem>>, vector<4x16x128xf32>
    %cst = arith.constant 0.00999999977 : f32
    %cst_5 = arith.constant 1.000000e+00 : f32
    %7 = vector.broadcast %cst : f32 to vector<4x16x128xf32>
    %8 = arith.maximumf %7, %6 : vector<4x16x128xf32>
    %9 = vector.broadcast %cst_5 : f32 to vector<4x16x128xf32>
    %10 = arith.minimumf %9, %8 : vector<4x16x128xf32>
    %cst_6 = arith.constant 1.270000e+02 : f32
    %11 = vector.broadcast %cst_6 : f32 to vector<4x16x128xf32>
    %12 = arith.mulf %10, %11 : vector<4x16x128xf32>
    %13 = math.roundeven %12 : vector<4x16x128xf32>
    %cst_7 = arith.constant 0.00787401571 : f32
    %14 = vector.broadcast %cst_7 : f32 to vector<4x16x128xf32>
    %15 = arith.mulf %13, %14 : vector<4x16x128xf32>
    %cst_8 = arith.constant 0.00999999977 : f32
    %16 = vector.broadcast %cst_8 : f32 to vector<4x16x128xf32>
    %17 = arith.minimumf %6, %16 : vector<4x16x128xf32>
    %cst_9 = arith.constant 1.270000e+04 : f32
    %18 = vector.broadcast %cst_9 : f32 to vector<4x16x128xf32>
    %19 = arith.mulf %17, %18 : vector<4x16x128xf32>
    %20 = math.roundeven %19 : vector<4x16x128xf32>
    %cst_10 = arith.constant 7.87401586E-5 : f32
    %21 = vector.broadcast %cst_10 : f32 to vector<4x16x128xf32>
    %22 = arith.mulf %20, %21 : vector<4x16x128xf32>
    %23 = arith.addf %15, %22 : vector<4x16x128xf32>
    %24 = arith.truncf %23 : vector<4x16x128xf32> to vector<4x16x128xbf16>
    %c0_11 = arith.constant 0 : index
    %c0_12 = arith.constant 0 : index
    %c0_13 = arith.constant 0 : index
    %25 = vector.load %arg7[%c0_11, %c0_12, %c0_13] : memref<4x16x32xf32, #tpu.memory_space<vmem>>, vector<4x16x32xf32>
    %26 = arith.index_cast %arg2 : i32 to index
    %c0_14 = arith.constant 0 : index
    %c0_15 = arith.constant 0 : index
    %c0_16 = arith.constant 0 : index
    %27 = vector.load %arg8[%26, %c0_14, %c0_15, %c0_16] : memref<2x4x128x32xbf16, #tpu.memory_space<vmem>>, vector<1x4x128x32xbf16>
    %28 = vector.shape_cast %27 : vector<1x4x128x32xbf16> to vector<4x128x32xbf16>
    "tpu.trace_start"() <{level = 10 : i32, message = "bmk,bkn->bmn"}> : () -> ()
    %cst_17 = arith.constant dense<0.000000e+00> : vector<4x16x32xf32>
    %29 = tpu.matmul %24, %28, %cst_17 {dimension_numbers = #tpu.dot_dimension_numbers<[2], [1], [1], [2], [0, 0, 0, 1, 1, 2], [0], [0]>} : vector<4x16x128xbf16>, vector<4x128x32xbf16>, vector<4x16x32xf32> -> vector<4x16x32xf32>
    "tpu.trace_stop"() : () -> ()
    %30 = arith.addf %25, %29 : vector<4x16x32xf32>
    %c0_18 = arith.constant 0 : index
    %c0_19 = arith.constant 0 : index
    %c0_20 = arith.constant 0 : index
    %31 = vector.load %arg7[%c0_18, %c0_19, %c0_20] : memref<4x16x32xf32, #tpu.memory_space<vmem>>, vector<4x16x32xf32>
    tpu.vector_store %arg7[%c0_18, %c0_19, %c0_20], %30 {strides = array<i32>} : memref<4x16x32xf32, #tpu.memory_space<vmem>>, vector<4x16x32xf32>,
    %c1_i32 = arith.constant 1 : i32
    %32 = arith.cmpi eq, %arg2, %c1_i32 : i32
    %33 = arith.extui %32 : i1 to i32
    %c0_i32_21 = arith.constant 0 : i32
    %34 = arith.cmpi ne, %33, %c0_i32_21 : i32
    scf.if %34 {
      %c0_22 = arith.constant 0 : index
      %c0_23 = arith.constant 0 : index
      %c0_24 = arith.constant 0 : index
      %35 = vector.load %arg7[%c0_22, %c0_23, %c0_24] : memref<4x16x32xf32, #tpu.memory_space<vmem>>, vector<4x16x32xf32>
      %c0_25 = arith.constant 0 : index
      %c0_26 = arith.constant 0 : index
      %c0_27 = arith.constant 0 : index
      %36 = vector.load %arg6[%c0_25, %c0_26, %c0_27] : memref<4x16x32xf32, #tpu.memory_space<vmem>>, vector<4x16x32xf32>
      tpu.vector_store %arg6[%c0_25, %c0_26, %c0_27], %35 {strides = array<i32>} : memref<4x16x32xf32, #tpu.memory_space<vmem>>, vector<4x16x32xf32>,
    } else {
    }
    return
  }
  func.func @transform_0(%arg0: i32, %arg1: i32, %arg2: i32) -> (i32, i32, i32) {
    %c0_i32 = arith.constant 0 : i32
    return %arg0, %arg1, %arg2 : i32, i32, i32
  }
  func.func @transform_1(%arg0: i32, %arg1: i32, %arg2: i32) -> (i32, i32, i32) {
    %c0_i32 = arith.constant 0 : i32
    %0 = arith.cmpi eq, %arg1, %c0_i32 : i32
    %c1_i32 = arith.constant 1 : i32
    %1 = arith.select %0, %arg2, %c1_i32 : i32
    %c0_i32_0 = arith.constant 0 : i32
    %c0_i32_1 = arith.constant 0 : i32
    return %arg0, %1, %c0_i32_0 : i32, i32, i32
  }
  func.func @transform_2(%arg0: i32, %arg1: i32, %arg2: i32) -> (i32, i32, i32) {
    %c1_i32 = arith.constant 1 : i32
    %c0_i32 = arith.constant 0 : i32
    %0 = arith.cmpi eq, %c1_i32, %c0_i32 : i32
    %c1_i32_0 = arith.constant 1 : i32
    %1 = arith.select %0, %c1_i32_0, %c1_i32 : i32
    %2 = arith.remsi %arg0, %1 : i32
    %c0_i32_1 = arith.constant 0 : i32
    %3 = arith.cmpi ne, %2, %c0_i32_1 : i32
    %c0_i32_2 = arith.constant 0 : i32
    %4 = arith.cmpi slt, %2, %c0_i32_2 : i32
    %c0_i32_3 = arith.constant 0 : i32
    %5 = arith.cmpi slt, %1, %c0_i32_3 : i32
    %6 = arith.xori %4, %5 : i1
    %7 = arith.andi %6, %3 : i1
    %8 = arith.addi %2, %1 : i32
    %9 = arith.select %7, %8, %2 : i32
    %c0_i32_4 = arith.constant 0 : i32
    %10 = arith.cmpi eq, %arg1, %c0_i32_4 : i32
    %c1_i32_5 = arith.constant 1 : i32
    %11 = arith.select %10, %arg2, %c1_i32_5 : i32
    %c0_i32_6 = arith.constant 0 : i32
    %c0_i32_7 = arith.constant 0 : i32
    return %9, %11, %c0_i32_6 : i32, i32, i32
  }
  func.func @transform_3(%arg0: i32, %arg1: i32, %arg2: i32) -> (i32, i32, i32) {
    %c0_i32 = arith.constant 0 : i32
    %c0_i32_0 = arith.constant 0 : i32
    return %arg0, %arg1, %c0_i32 : i32, i32, i32
  }
}

</mosaic_0001>

<llo_original>
// kernel: tpu_custom_call.1
$region0: #{tpu_custom_call.1}
  #allocation0 [shape = 'u32[]', space=smem, size = 0x4, offset = 0x4, fixed_abs, tag = 'smem constant byte address 0x4 - core index']
  #allocation1 [shape = 'u32[144,128]{1,0:T(1,128)}', space=vmem, size = 0x12000, scoped, tag = 'internal scratch']
  #allocation2 [shape = 'f32[4,16,32]{2,1,0:T(8,128)}', space=vmem, size = 0x8000, scoped, tag = 'scratch operand']
  #allocation3 [shape = 'bf16[2,4,128,32]{3,2,1,0:T(16,128)(2,1)}', space=vmem, size = 0x40000, scoped, tag = 'scratch operand']
  #allocation9 [shape = 's32[]', space=sflag, size = 0x4, offset = 0, fixed_abs, tag = 'sflag constant byte address 0x0 - dummy sync flag']
  %s0 = inlined_call_operand.vmem [shape: f32[8,32,256], index: 0, kind: input, shape index: {}]
  %s1 = inlined_call_operand.vmem [shape: f32[8,256,32], index: 1, kind: input, shape index: {}]
  %s2 = inlined_call_operand.vmem [shape: f32[4,256,32], index: 2, kind: input, shape index: {}]
  %s3 = inlined_call_operand.hbm [shape: f32[8,32,32], index: 3, kind: output, shape index: {}]
  %s4 = sld [smem:[#allocation0]]
  $region171: #{tpu_custom_call.1} parent=0
    _
  %s6 = ssub.s32 1, %s4
  %s7 = scalar_select 0, %s6, %s4
  $region1: #{tpu_custom_call.1} parent=0
    #allocation4 [shape = 'u8[65536]{0}', space=vmem, size = 0x10000, scoped, tag = 'input window, operand 0']
    #allocation5 [shape = 'u8[524288]{0}', space=vmem, size = 0x80000, scoped, tag = 'input window, operand 1']
    #allocation6 [shape = 'u8[524288]{0}', space=vmem, size = 0x80000, scoped, tag = 'input window, operand 2']
    #allocation7 [shape = 'u8[65536]{0}', space=vmem, size = 0x10000, scoped, tag = 'output window, operand 0']
    #allocation8 [shape = 's32[2]{0}', space=sflag, size = 0x8, scoped, tag = 'scoped memory for tpu_custom_call.1']
    %8 = vsyncpa [#allocation8], 0
    %s9 = scalar_lea.sflag [#allocation8], 1
    %10 = vsyncpa %s9, 0
    loop: start=0, step=1, limit=10
    $region2: #{tpu_custom_call.1} parent=1 // loop_pre_header
      _
    $region3: #{tpu_custom_call.1} parent=1 // loop_header
      %s12 = sphi 0, %s16
      %p13 = scmp.ge.s32.totalorder %s12, 10
      %s19 = sphi 0, %s38
      %s20 = sphi 0, %s34
      %s21 = sphi 0, %s30
      %s22 = sphi 0, %s19
      %s23 = sphi 0, %s20
      %s24 = sphi 0, %s21
      %s25 = sphi 0, %s22
      %s26 = sphi 0, %s23
      %s27 = sphi 0, %s24
      %s45 = sphi 0, %s47
      %s48 = sphi 0, %s45
      %s49 = sphi 0, %s48
      %s65 = sphi 0, %s49
      %s77 = sphi 0, %s79
      %s80 = sphi 0, %s77
      %s81 = sphi 0, %s80
      %s97 = sphi 0, %s81
      %s107 = sphi 0, %s109
      %s110 = sphi 0, %s107
      %s111 = sphi 0, %s110
      %s127 = sphi 0, %s111
      %s135 = sphi 0, %s137
      %s138 = sphi 0, %s135
      %s139 = sphi 0, %s138
      %s155 = sphi 0, %s139
    $region4: #{tpu_custom_call.1} parent=1 // loop_header_branch
      %15 = sbr.rel (%p13) target = $region8
    $region5: #{tpu_custom_call.1} parent=1 // loop_body
      %s17 = ssub.s32 %s12, 1
      %s18 = ssub.s32 %s12, 2
      %s28 = sadd.s32 1, %s21
      %p29 = scmp.ge.s32.totalorder %s28, 2
      %s30 = scalar_select %p29, 0, %s28
      %s31 = sadd.s32 1, %s20
      %s32 = scalar_select %p29, %s31, %s20
      %p33 = scmp.ge.s32.totalorder %s32, 2
      %s34 = scalar_select %p33, 0, %s32
      %s35 = sadd.s32 1, %s19
      %s36 = scalar_select %p33, %s35, %s19
      %p37 = scmp.ge.s32.totalorder %s36, 2
      %s38 = scalar_select %p37, 0, %s36
      %s39 = ssub.s32 %s19, %s38
      %s40 = ssub.s32 %s20, %s34
      %s41 = sor.u32 %s39, %s40
      %s42 = ssub.s32 %s21, %s30
      %s43 = sor.u32 %s41, %s42
      %p44 = scmp.eq.s32.totalorder %s43, 0
      %s46 = sadd.s32 %s45, 1
      %s47 = scalar_select %p44, %s45, %s46
      %p50 = pneg %p44
      %p51 = scmp.eq.s32.totalorder %s12, 7
      %p52 = por %p50, %p51
      %p53 = scmp.ne.s32.totalorder %s45, %s48
      %p54 = scmp.eq.s32.totalorder %s12, 0
      %p55 = por %p53, %p54
      %p56 = scmp.ne.s32.totalorder %s45, %s48
      %p57 = scmp.eq.s32.totalorder %s17, 7
      %p58 = por %p56, %p57
      %p59 = scmp.ne.s32.totalorder %s48, %s49
      %p60 = scmp.eq.s32.totalorder %s17, 0
      %p61 = por %p59, %p60
      %p62 = scmp.ne.s32.totalorder %s48, %s49
      %p63 = scmp.eq.s32.totalorder %s18, 7
      %p64 = por %p62, %p63
      %p66 = scmp.ne.s32.totalorder %s49, %s65
      %p67 = scmp.eq.s32.totalorder %s18, 0
      %p68 = por %p66, %p67
      %p69 = scmp.eq.s32.totalorder %s20, 0
      %s70 = scalar_select %p69, %s21, 1
      %p71 = scmp.eq.s32.totalorder %s34, 0
      %s72 = scalar_select %p71, %s30, 1
      %s73 = ssub.s32 %s19, %s38
      %s74 = ssub.s32 %s70, %s72
      %s75 = sor.u32 %s73, %s74
      %p76 = scmp.eq.s32.totalorder %s75, 0
      %s78 = sadd.s32 %s77, 1
      %s79 = scalar_select %p76, %s77, %s78
      %p82 = pneg %p76
      %p83 = scmp.eq.s32.totalorder %s12, 7
      %p84 = por %p82, %p83
      %p85 = scmp.ne.s32.totalorder %s77, %s80
      %p86 = scmp.eq.s32.totalorder %s12, 0
      %p87 = por %p85, %p86
      %p88 = scmp.ne.s32.totalorder %s77, %s80
      %p89 = scmp.eq.s32.totalorder %s17, 7
      %p90 = por %p88, %p89
      %p91 = scmp.ne.s32.totalorder %s80, %s81
      %p92 = scmp.eq.s32.totalorder %s17, 0
      %p93 = por %p91, %p92
      %p94 = scmp.ne.s32.totalorder %s80, %s81
      %p95 = scmp.eq.s32.totalorder %s18, 7
      %p96 = por %p94, %p95
      %p98 = scmp.ne.s32.totalorder %s81, %s97
      %p99 = scmp.eq.s32.totalorder %s18, 0
      %p100 = por %p98, %p99
      %p101 = scmp.eq.s32.totalorder %s20, 0
      %s102 = scalar_select %p101, %s21, 1
      %p103 = scmp.eq.s32.totalorder %s34, 0
      %s104 = scalar_select %p103, %s30, 1
      %s105 = ssub.s32 %s102, %s104
      %p106 = scmp.eq.s32.totalorder %s105, 0
      %s108 = sadd.s32 %s107, 1
      %s109 = scalar_select %p106, %s107, %s108
      %p112 = pneg %p106
      %p113 = scmp.eq.s32.totalorder %s12, 7
      %p114 = por %p112, %p113
      %p115 = scmp.ne.s32.totalorder %s107, %s110
      %p116 = scmp.eq.s32.totalorder %s12, 0
      %p117 = por %p115, %p116
      %p118 = scmp.ne.s32.totalorder %s107, %s110
      %p119 = scmp.eq.s32.totalorder %s17, 7
      %p120 = por %p118, %p119
      %p121 = scmp.ne.s32.totalorder %s110, %s111
      %p122 = scmp.eq.s32.totalorder %s17, 0
      %p123 = por %p121, %p122
      %p124 = scmp.ne.s32.totalorder %s110, %s111
      %p125 = scmp.eq.s32.totalorder %s18, 7
      %p126 = por %p124, %p125
      %p128 = scmp.ne.s32.totalorder %s111, %s127
      %p129 = scmp.eq.s32.totalorder %s18, 0
      %p130 = por %p128, %p129
      %s131 = ssub.s32 %s19, %s38
      %s132 = ssub.s32 %s20, %s34
      %s133 = sor.u32 %s131, %s132
      %p134 = scmp.eq.s32.totalorder %s133, 0
      %s136 = sadd.s32 %s135, 1
      %s137 = scalar_select %p134, %s135, %s136
      %p140 = pneg %p134
      %p141 = scmp.eq.s32.totalorder %s12, 7
      %p142 = por %p140, %p141
      %p143 = scmp.ne.s32.totalorder %s135, %s138
      %p144 = scmp.eq.s32.totalorder %s12, 0
      %p145 = por %p143, %p144
      %p146 = scmp.ne.s32.totalorder %s135, %s138
      %p147 = scmp.eq.s32.totalorder %s17, 7
      %p148 = por %p146, %p147
      %p149 = scmp.ne.s32.totalorder %s138, %s139
      %p150 = scmp.eq.s32.totalorder %s17, 0
      %p151 = por %p149, %p150
      %p152 = scmp.ne.s32.totalorder %s138, %s139
      %p153 = scmp.eq.s32.totalorder %s18, 7
      %p154 = por %p152, %p153
      %p156 = scmp.ne.s32.totalorder %s139, %s155
      %p157 = scmp.eq.s32.totalorder %s18, 0
      %p158 = por %p156, %p157
      %p159 = scmp.le.s32.totalorder 1, %s12
      %p160 = scmp.lt.s32.totalorder %s12, 9
      %p161 = pnand %p159, %p160
      %p162 = pneg %p161
      // Predicated region
      $region9: #{tpu_custom_call.1} parent=5 // pred_check
        _
      $region10: #{tpu_custom_call.1} parent=5 // pred_check_branch
        %164 = sbr.rel (%p161) target = $region12
      $region11: #{tpu_custom_call.1} parent=5 // pred_region
        %s165 = ssub.s32 %s12, 1
      $region12: #{tpu_custom_call.1} parent=5 // pred_fallthru
        _
      %p166 = scmp.lt.s32.totalorder %s12, 8
      // Predicated region
      $region13: #{tpu_custom_call.1} parent=5 // pred_check
        %p167 = pneg %p166
      $region14: #{tpu_custom_call.1} parent=5 // pred_check_branch
        %169 = sbr.rel (%p167) target = $region16
      $region15: #{tpu_custom_call.1} parent=5 // pred_region
        // Predicated region
        $region17: #{tpu_custom_call.1} parent=15 // pred_check
          %p170 = pneg %p55
        $region18: #{tpu_custom_call.1} parent=15 // pred_check_branch
          %172 = sbr.rel (%p170) target = $region20
        $region19: #{tpu_custom_call.1} parent=15 // pred_region
          %s173 = sand.u32 %s45, 1
          %s174 = sand.u32 %s45, 1
          %s175 = smul.addr %s174, 64
          %s176 = scalar_lea.vmem [#allocation4], %s175
          %s177 = smul.u32 4, %s19
          %s178 = smul.u32 2, %s20
          %s179 = smul.addr %s178, 2
          %s180 = sadd.s32 %s21, %s179
          %s181 = smul.addr %s177, 8
          %s182 = sadd.s32 %s180, %s181
          %s183 = smul.addr %s182, 8
          %s184 = scalar_lea.vmem %s0, %s183
          // Predicated region
          $region21: #{tpu_custom_call.1} parent=19 // pred_check
            _
          $region22: #{tpu_custom_call.1} parent=19 // pred_check_branch
            %186 = sbr.rel (0) target = $region24
          $region23: #{tpu_custom_call.1} parent=19 // pred_region
            // Predicated region
            $region25: #{tpu_custom_call.1} parent=23 // pred_check
              _
            $region26: #{tpu_custom_call.1} parent=23 // pred_check_branch
              %188 = sbr.rel (0) target = $region28
            $region27: #{tpu_custom_call.1} parent=23 // pred_region
              // Predicated region
              $region40: #{tpu_custom_call.1} parent=27 // pred_check
                _
              $region41: #{tpu_custom_call.1} parent=27 // pred_check_branch
                %217 = sbr.rel (0) target = $region43
              $region42: #{tpu_custom_call.1} parent=27 // pred_region
                loop: start=0, step=1, limit=1
                $region44: #{tpu_custom_call.1} parent=42 // loop_pre_header
                  _
                $region45: #{tpu_custom_call.1} parent=42 // loop_header
                  %s219 = sphi 0, %s223
                  %p220 = scmp.ge.s32.totalorder %s219, 1
                  %s224 = sphi %s184, %s184
                  %s225 = sphi %s176, %s176
                $region46: #{tpu_custom_call.1} parent=42 // loop_header_branch
                  %222 = sbr.rel (%p220) target = $region50
                $region47: #{tpu_custom_call.1} parent=42 // loop_body
                  %v226 = vld [vmem:[%s224] sm:$0xff]
                  %227 = vst [vmem:[%s225] sm:$0xff] %v226
                  %v228 = vld [vmem:[%s224 + $0x10] sm:$0xff]
                  %229 = vst [vmem:[%s225 + $0x8] sm:$0xff] %v228
                  %v230 = vld [vmem:[%s224 + $0x40] sm:$0xff]
                  %231 = vst [vmem:[%s225 + $0x10] sm:$0xff] %v230
                  %v232 = vld [vmem:[%s224 + $0x50] sm:$0xff]
                  %233 = vst [vmem:[%s225 + $0x18] sm:$0xff] %v232
                  %v234 = vld [vmem:[%s224 + $0x80] sm:$0xff]
                  %235 = vst [vmem:[%s225 + $0x20] sm:$0xff] %v234
                  %v236 = vld [vmem:[%s224 + $0x90] sm:$0xff]
                  %237 = vst [vmem:[%s225 + $0x28] sm:$0xff] %v236
                  %v238 = vld [vmem:[%s224 + $0xc0] sm:$0xff]
                  %239 = vst [vmem:[%s225 + $0x30] sm:$0xff] %v238
                  %v240 = vld [vmem:[%s224 + $0xd0] sm:$0xff]
                  %241 = vst [vmem:[%s225 + $0x38] sm:$0xff] %v240
                $region48: #{tpu_custom_call.1} parent=42 // loop_footer
                  %s223 = sadd.s32 1, %s219
                $region49: #{tpu_custom_call.1} parent=42 // loop_footer_branch
                  %218 = sbr.rel target = $region45
                $region50: #{tpu_custom_call.1} parent=42 // loop_exit
                  _
              $region43: #{tpu_custom_call.1} parent=27 // pred_fallthru
                _
              // Predicated region
              $region51: #{tpu_custom_call.1} parent=27 // pred_check
                _
              $region52: #{tpu_custom_call.1} parent=27 // pred_check_branch
                %243 = sbr.rel target = $region54
              $region53: #{tpu_custom_call.1} parent=27 // pred_region
                _
              $region54: #{tpu_custom_call.1} parent=27 // pred_fallthru
                _
            $region28: #{tpu_custom_call.1} parent=23 // pred_fallthru
              _
            // Predicated region
            $region29: #{tpu_custom_call.1} parent=23 // pred_check
              _
            $region30: #{tpu_custom_call.1} parent=23 // pred_check_branch
              %190 = sbr.rel target = $region32
            $region31: #{tpu_custom_call.1} parent=23 // pred_region
              loop: start=0, step=1, limit=1
              $region33: #{tpu_custom_call.1} parent=31 // loop_pre_header
                _
              $region34: #{tpu_custom_call.1} parent=31 // loop_header
                %s193 = sphi 0, %s197
                %p194 = scmp.ge.s32.totalorder %s193, 1
                %s198 = sphi %s184, %s184
                %s199 = sphi %s176, %s176
              $region35: #{tpu_custom_call.1} parent=31 // loop_header_branch
                %196 = sbr.rel (%p194) target = $region39
              $region36: #{tpu_custom_call.1} parent=31 // loop_body
                %v200 = vld [vmem:[%s198] sm:$0xff]
                %201 = vst [vmem:[%s199] sm:$0xff] %v200
                %v202 = vld [vmem:[%s198 + $0x10] sm:$0xff]
                %203 = vst [vmem:[%s199 + $0x8] sm:$0xff] %v202
                %v204 = vld [vmem:[%s198 + $0x40] sm:$0xff]
                %205 = vst [vmem:[%s199 + $0x10] sm:$0xff] %v204
                %v206 = vld [vmem:[%s198 + $0x50] sm:$0xff]
                %207 = vst [vmem:[%s199 + $0x18] sm:$0xff] %v206
                %v208 = vld [vmem:[%s198 + $0x80] sm:$0xff]
                %209 = vst [vmem:[%s199 + $0x20] sm:$0xff] %v208
                %v210 = vld [vmem:[%s198 + $0x90] sm:$0xff]
                %211 = vst [vmem:[%s199 + $0x28] sm:$0xff] %v210
                %v212 = vld [vmem:[%s198 + $0xc0] sm:$0xff]
                %213 = vst [vmem:[%s199 + $0x30] sm:$0xff] %v212
                %v214 = vld [vmem:[%s198 + $0xd0] sm:$0xff]
                %215 = vst [vmem:[%s199 + $0x38] sm:$0xff] %v214
              $region37: #{tpu_custom_call.1} parent=31 // loop_footer
                %s197 = sadd.s32 1, %s193
              $region38: #{tpu_custom_call.1} parent=31 // loop_footer_branch
                %192 = sbr.rel target = $region34
              $region39: #{tpu_custom_call.1} parent=31 // loop_exit
                _
            $region32: #{tpu_custom_call.1} parent=23 // pred_fallthru
              _
          $region24: #{tpu_custom_call.1} parent=19 // pred_fallthru
            _
          %244 = vnop
        $region20: #{tpu_custom_call.1} parent=15 // pred_fallthru
          _
        // Predicated region
        $region55: #{tpu_custom_call.1} parent=15 // pred_check
          %p245 = pneg %p87
        $region56: #{tpu_custom_call.1} parent=15 // pred_check_branch
          %247 = sbr.rel (%p245) target = $region58
        $region57: #{tpu_custom_call.1} parent=15 // pred_region
          %s248 = sand.u32 %s77, 1
          %s249 = sand.u32 %s77, 1
          %s250 = smul.addr %s249, 512
          %s251 = scalar_lea.vmem [#allocation5], %s250
          %p252 = scmp.eq.s32.totalorder %s20, 0
          %s253 = scalar_select %p252, %s21, 1
          %s254 = smul.u32 4, %s19
          %s255 = smul.u32 16, %s253
          %s256 = smul.addr %s254, 32
          %s257 = sadd.s32 %s255, %s256
          %s258 = smul.addr %s257, 8
          %s259 = scalar_lea.vmem %s1, %s258
          // Predicated region
          $region59: #{tpu_custom_call.1} parent=57 // pred_check
            _
          $region60: #{tpu_custom_call.1} parent=57 // pred_check_branch
            %261 = sbr.rel (0) target = $region62
          $region61: #{tpu_custom_call.1} parent=57 // pred_region
            // Predicated region
            $region63: #{tpu_custom_call.1} parent=61 // pred_check
              _
            $region64: #{tpu_custom_call.1} parent=61 // pred_check_branch
              %263 = sbr.rel (0) target = $region66
            $region65: #{tpu_custom_call.1} parent=61 // pred_region
              // Predicated region
              $region78: #{tpu_custom_call.1} parent=65 // pred_check
                _
              $region79: #{tpu_custom_call.1} parent=65 // pred_check_branch
                %404 = sbr.rel (0) target = $region81
              $region80: #{tpu_custom_call.1} parent=65 // pred_region
                loop: start=0, step=1, limit=1
                $region82: #{tpu_custom_call.1} parent=80 // loop_pre_header
                  _
                $region83: #{tpu_custom_call.1} parent=80 // loop_header
                  %s406 = sphi 0, %s410
                  %p407 = scmp.ge.s32.totalorder %s406, 1
                  %s411 = sphi %s259, %s259
                  %s412 = sphi %s251, %s251
                $region84: #{tpu_custom_call.1} parent=80 // loop_header_branch
                  %409 = sbr.rel (%p407) target = $region88
                $region85: #{tpu_custom_call.1} parent=80 // loop_body
                  %v413 = vld [vmem:[%s411] sm:$0xff]
                  %414 = vst [vmem:[%s412] sm:$0xff] %v413
                  %v415 = vld [vmem:[%s411 + $0x8] sm:$0xff]
                  %416 = vst [vmem:[%s412 + $0x8] sm:$0xff] %v415
                  %v417 = vld [vmem:[%s411 + $0x10] sm:$0xff]
                  %418 = vst [vmem:[%s412 + $0x10] sm:$0xff] %v417
                  %v419 = vld [vmem:[%s411 + $0x18] sm:$0xff]
                  %420 = vst [vmem:[%s412 + $0x18] sm:$0xff] %v419
                  %v421 = vld [vmem:[%s411 + $0x20] sm:$0xff]
                  %422 = vst [vmem:[%s412 + $0x20] sm:$0xff] %v421
                  %v423 = vld [vmem:[%s411 + $0x28] sm:$0xff]
                  %424 = vst [vmem:[%s412 + $0x28] sm:$0xff] %v423
                  %v425 = vld [vmem:[%s411 + $0x30] sm:$0xff]
                  %426 = vst [vmem:[%s412 + $0x30] sm:$0xff] %v425
                  %v427 = vld [vmem:[%s411 + $0x38] sm:$0xff]
                  %428 = vst [vmem:[%s412 + $0x38] sm:$0xff] %v427
                  %v429 = vld [vmem:[%s411 + $0x40] sm:$0xff]
                  %430 = vst [vmem:[%s412 + $0x40] sm:$0xff] %v429
                  %v431 = vld [vmem:[%s411 + $0x48] sm:$0xff]
                  %432 = vst [vmem:[%s412 + $0x48] sm:$0xff] %v431
                  %v433 = vld [vmem:[%s411 + $0x50] sm:$0xff]
                  %434 = vst [vmem:[%s412 + $0x50] sm:$0xff] %v433
                  %v435 = vld [vmem:[%s411 + $0x58] sm:$0xff]
                  %436 = vst [vmem:[%s412 + $0x58] sm:$0xff] %v435
                  %v437 = vld [vmem:[%s411 + $0x60] sm:$0xff]
                  %438 = vst [vmem:[%s412 + $0x60] sm:$0xff] %v437
                  %v439 = vld [vmem:[%s411 + $0x68] sm:$0xff]
                  %440 = vst [vmem:[%s412 + $0x68] sm:$0xff] %v439
                  %v441 = vld [vmem:[%s411 + $0x70] sm:$0xff]
                  %442 = vst [vmem:[%s412 + $0x70] sm:$0xff] %v441
                  %v443 = vld [vmem:[%s411 + $0x78] sm:$0xff]
                  %444 = vst [vmem:[%s412 + $0x78] sm:$0xff] %v443
                  %v445 = vld [vmem:[%s411 + $0x100] sm:$0xff]
                  %446 = vst [vmem:[%s412 + $0x80] sm:$0xff] %v445
                  %v447 = vld [vmem:[%s411 + $0x108] sm:$0xff]
                  %448 = vst [vmem:[%s412 + $0x88] sm:$0xff] %v447
                  %v449 = vld [vmem:[%s411 + $0x110] sm:$0xff]
                  %450 = vst [vmem:[%s412 + $0x90] sm:$0xff] %v449
                  %v451 = vld [vmem:[%s411 + $0x118] sm:$0xff]
                  %452 = vst [vmem:[%s412 + $0x98] sm:$0xff] %v451
                  %v453 = vld [vmem:[%s411 + $0x120] sm:$0xff]
                  %454 = vst [vmem:[%s412 + $0xa0] sm:$0xff] %v453
                  %v455 = vld [vmem:[%s411 + $0x128] sm:$0xff]
                  %456 = vst [vmem:[%s412 + $0xa8] sm:$0xff] %v455
                  %v457 = vld [vmem:[%s411 + $0x130] sm:$0xff]
                  %458 = vst [vmem:[%s412 + $0xb0] sm:$0xff] %v457
                  %v459 = vld [vmem:[%s411 + $0x138] sm:$0xff]
                  %460 = vst [vmem:[%s412 + $0xb8] sm:$0xff] %v459
                  %v461 = vld [vmem:[%s411 + $0x140] sm:$0xff]
                  %462 = vst [vmem:[%s412 + $0xc0] sm:$0xff] %v461
                  %v463 = vld [vmem:[%s411 + $0x148] sm:$0xff]
                  %464 = vst [vmem:[%s412 + $0xc8] sm:$0xff] %v463
                  %v465 = vld [vmem:[%s411 + $0x150] sm:$0xff]
                  %466 = vst [vmem:[%s412 + $0xd0] sm:$0xff] %v465
                  %v467 = vld [vmem:[%s411 + $0x158] sm:$0xff]
                  %468 = vst [vmem:[%s412 + $0xd8] sm:$0xff] %v467
                  %v469 = vld [vmem:[%s411 + $0x160] sm:$0xff]
                  %470 = vst [vmem:[%s412 + $0xe0] sm:$0xff] %v469
                  %v471 = vld [vmem:[%s411 + $0x168] sm:$0xff]
                  %472 = vst [vmem:[%s412 + $0xe8] sm:$0xff] %v471
                  %v473 = vld [vmem:[%s411 + $0x170] sm:$0xff]
                  %474 = vst [vmem:[%s412 + $0xf0] sm:$0xff] %v473
                  %v475 = vld [vmem:[%s411 + $0x178] sm:$0xff]
                  %476 = vst [vmem:[%s412 + $0xf8] sm:$0xff] %v475
                  %v477 = vld [vmem:[%s411 + $0x200] sm:$0xff]
                  %478 = vst [vmem:[%s412 + $0x100] sm:$0xff] %v477
                  %v479 = vld [vmem:[%s411 + $0x208] sm:$0xff]
                  %480 = vst [vmem:[%s412 + $0x108] sm:$0xff] %v479
                  %v481 = vld [vmem:[%s411 + $0x210] sm:$0xff]
                  %482 = vst [vmem:[%s412 + $0x110] sm:$0xff] %v481
                  %v483 = vld [vmem:[%s411 + $0x218] sm:$0xff]
                  %484 = vst [vmem:[%s412 + $0x118] sm:$0xff] %v483
                  %v485 = vld [vmem:[%s411 + $0x220] sm:$0xff]
                  %486 = vst [vmem:[%s412 + $0x120] sm:$0xff] %v485
                  %v487 = vld [vmem:[%s411 + $0x228] sm:$0xff]
                  %488 = vst [vmem:[%s412 + $0x128] sm:$0xff] %v487
                  %v489 = vld [vmem:[%s411 + $0x230] sm:$0xff]
                  %490 = vst [vmem:[%s412 + $0x130] sm:$0xff] %v489
                  %v491 = vld [vmem:[%s411 + $0x238] sm:$0xff]
                  %492 = vst [vmem:[%s412 + $0x138] sm:$0xff] %v491
                  %v493 = vld [vmem:[%s411 + $0x240] sm:$0xff]
                  %494 = vst [vmem:[%s412 + $0x140] sm:$0xff] %v493
                  %v495 = vld [vmem:[%s411 + $0x248] sm:$0xff]
                  %496 = vst [vmem:[%s412 + $0x148] sm:$0xff] %v495
                  %v497 = vld [vmem:[%s411 + $0x250] sm:$0xff]
                  %498 = vst [vmem:[%s412 + $0x150] sm:$0xff] %v497
                  %v499 = vld [vmem:[%s411 + $0x258] sm:$0xff]
                  %500 = vst [vmem:[%s412 + $0x158] sm:$0xff] %v499
                  %v501 = vld [vmem:[%s411 + $0x260] sm:$0xff]
                  %502 = vst [vmem:[%s412 + $0x160] sm:$0xff] %v501
                  %v503 = vld [vmem:[%s411 + $0x268] sm:$0xff]
                  %504 = vst [vmem:[%s412 + $0x168] sm:$0xff] %v503
                  %v505 = vld [vmem:[%s411 + $0x270] sm:$0xff]
                  %506 = vst [vmem:[%s412 + $0x170] sm:$0xff] %v505
                  %v507 = vld [vmem:[%s411 + $0x278] sm:$0xff]
                  %508 = vst [vmem:[%s412 + $0x178] sm:$0xff] %v507
                  %v509 = vld [vmem:[%s411 + $0x300] sm:$0xff]
                  %510 = vst [vmem:[%s412 + $0x180] sm:$0xff] %v509
                  %v511 = vld [vmem:[%s411 + $0x308] sm:$0xff]
                  %512 = vst [vmem:[%s412 + $0x188] sm:$0xff] %v511
                  %v513 = vld [vmem:[%s411 + $0x310] sm:$0xff]
                  %514 = vst [vmem:[%s412 + $0x190] sm:$0xff] %v513
                  %v515 = vld [vmem:[%s411 + $0x318] sm:$0xff]
                  %516 = vst [vmem:[%s412 + $0x198] sm:$0xff] %v515
                  %v517 = vld [vmem:[%s411 + $0x320] sm:$0xff]
                  %518 = vst [vmem:[%s412 + $0x1a0] sm:$0xff] %v517
                  %v519 = vld [vmem:[%s411 + $0x328] sm:$0xff]
                  %520 = vst [vmem:[%s412 + $0x1a8] sm:$0xff] %v519
                  %v521 = vld [vmem:[%s411 + $0x330] sm:$0xff]
                  %522 = vst [vmem:[%s412 + $0x1b0] sm:$0xff] %v521
                  %v523 = vld [vmem:[%s411 + $0x338] sm:$0xff]
                  %524 = vst [vmem:[%s412 + $0x1b8] sm:$0xff] %v523
                  %v525 = vld [vmem:[%s411 + $0x340] sm:$0xff]
                  %526 = vst [vmem:[%s412 + $0x1c0] sm:$0xff] %v525
                  %v527 = vld [vmem:[%s411 + $0x348] sm:$0xff]
                  %528 = vst [vmem:[%s412 + $0x1c8] sm:$0xff] %v527
                  %v529 = vld [vmem:[%s411 + $0x350] sm:$0xff]
                  %530 = vst [vmem:[%s412 + $0x1d0] sm:$0xff] %v529
                  %v531 = vld [vmem:[%s411 + $0x358] sm:$0xff]
                  %532 = vst [vmem:[%s412 + $0x1d8] sm:$0xff] %v531
                  %v533 = vld [vmem:[%s411 + $0x360] sm:$0xff]
                  %534 = vst [vmem:[%s412 + $0x1e0] sm:$0xff] %v533
                  %v535 = vld [vmem:[%s411 + $0x368] sm:$0xff]
                  %536 = vst [vmem:[%s412 + $0x1e8] sm:$0xff] %v535
                  %v537 = vld [vmem:[%s411 + $0x370] sm:$0xff]
                  %538 = vst [vmem:[%s412 + $0x1f0] sm:$0xff] %v537
                  %v539 = vld [vmem:[%s411 + $0x378] sm:$0xff]
                  %540 = vst [vmem:[%s412 + $0x1f8] sm:$0xff] %v539
                $region86: #{tpu_custom_call.1} parent=80 // loop_footer
                  %s410 = sadd.s32 1, %s406
                $region87: #{tpu_custom_call.1} parent=80 // loop_footer_branch
                  %405 = sbr.rel target = $region83
                $region88: #{tpu_custom_call.1} parent=80 // loop_exit
                  _
              $region81: #{tpu_custom_call.1} parent=65 // pred_fallthru
                _
              // Predicated region
              $region89: #{tpu_custom_call.1} parent=65 // pred_check
                _
              $region90: #{tpu_custom_call.1} parent=65 // pred_check_branch
                %542 = sbr.rel target = $region92
              $region91: #{tpu_custom_call.1} parent=65 // pred_region
                _
              $region92: #{tpu_custom_call.1} parent=65 // pred_fallthru
                _
            $region66: #{tpu_custom_call.1} parent=61 // pred_fallthru
              _
            // Predicated region
            $region67: #{tpu_custom_call.1} parent=61 // pred_check
              _
            $region68: #{tpu_custom_call.1} parent=61 // pred_check_branch
              %265 = sbr.rel target = $region70
            $region69: #{tpu_custom_call.1} parent=61 // pred_region
              loop: start=0, step=1, limit=1
              $region71: #{tpu_custom_call.1} parent=69 // loop_pre_header
                _
              $region72: #{tpu_custom_call.1} parent=69 // loop_header
                %s268 = sphi 0, %s272
                %p269 = scmp.ge.s32.totalorder %s268, 1
                %s273 = sphi %s259, %s259
                %s274 = sphi %s251, %s251
              $region73: #{tpu_custom_call.1} parent=69 // loop_header_branch
                %271 = sbr.rel (%p269) target = $region77
              $region74: #{tpu_custom_call.1} parent=69 // loop_body
                %v275 = vld [vmem:[%s273] sm:$0xff]
                %276 = vst [vmem:[%s274] sm:$0xff] %v275
                %v277 = vld [vmem:[%s273 + $0x8] sm:$0xff]
                %278 = vst [vmem:[%s274 + $0x8] sm:$0xff] %v277
                %v279 = vld [vmem:[%s273 + $0x10] sm:$0xff]
                %280 = vst [vmem:[%s274 + $0x10] sm:$0xff] %v279
                %v281 = vld [vmem:[%s273 + $0x18] sm:$0xff]
                %282 = vst [vmem:[%s274 + $0x18] sm:$0xff] %v281
                %v283 = vld [vmem:[%s273 + $0x20] sm:$0xff]
                %284 = vst [vmem:[%s274 + $0x20] sm:$0xff] %v283
                %v285 = vld [vmem:[%s273 + $0x28] sm:$0xff]
                %286 = vst [vmem:[%s274 + $0x28] sm:$0xff] %v285
                %v287 = vld [vmem:[%s273 + $0x30] sm:$0xff]
                %288 = vst [vmem:[%s274 + $0x30] sm:$0xff] %v287
                %v289 = vld [vmem:[%s273 + $0x38] sm:$0xff]
                %290 = vst [vmem:[%s274 + $0x38] sm:$0xff] %v289
                %v291 = vld [vmem:[%s273 + $0x40] sm:$0xff]
                %292 = vst [vmem:[%s274 + $0x40] sm:$0xff] %v291
                %v293 = vld [vmem:[%s273 + $0x48] sm:$0xff]
                %294 = vst [vmem:[%s274 + $0x48] sm:$0xff] %v293
                %v295 = vld [vmem:[%s273 + $0x50] sm:$0xff]
                %296 = vst [vmem:[%s274 + $0x50] sm:$0xff] %v295
                %v297 = vld [vmem:[%s273 + $0x58] sm:$0xff]
                %298 = vst [vmem:[%s274 + $0x58] sm:$0xff] %v297
                %v299 = vld [vmem:[%s273 + $0x60] sm:$0xff]
                %300 = vst [vmem:[%s274 + $0x60] sm:$0xff] %v299
                %v301 = vld [vmem:[%s273 + $0x68] sm:$0xff]
                %302 = vst [vmem:[%s274 + $0x68] sm:$0xff] %v301
                %v303 = vld [vmem:[%s273 + $0x70] sm:$0xff]
                %304 = vst [vmem:[%s274 + $0x70] sm:$0xff] %v303
                %v305 = vld [vmem:[%s273 + $0x78] sm:$0xff]
                %306 = vst [vmem:[%s274 + $0x78] sm:$0xff] %v305
                %v307 = vld [vmem:[%s273 + $0x100] sm:$0xff]
                %308 = vst [vmem:[%s274 + $0x80] sm:$0xff] %v307
                %v309 = vld [vmem:[%s273 + $0x108] sm:$0xff]
                %310 = vst [vmem:[%s274 + $0x88] sm:$0xff] %v309
                %v311 = vld [vmem:[%s273 + $0x110] sm:$0xff]
                %312 = vst [vmem:[%s274 + $0x90] sm:$0xff] %v311
                %v313 = vld [vmem:[%s273 + $0x118] sm:$0xff]
                %314 = vst [vmem:[%s274 + $0x98] sm:$0xff] %v313
                %v315 = vld [vmem:[%s273 + $0x120] sm:$0xff]
                %316 = vst [vmem:[%s274 + $0xa0] sm:$0xff] %v315
                %v317 = vld [vmem:[%s273 + $0x128] sm:$0xff]
                %318 = vst [vmem:[%s274 + $0xa8] sm:$0xff] %v317
                %v319 = vld [vmem:[%s273 + $0x130] sm:$0xff]
                %320 = vst [vmem:[%s274 + $0xb0] sm:$0xff] %v319
                %v321 = vld [vmem:[%s273 + $0x138] sm:$0xff]
                %322 = vst [vmem:[%s274 + $0xb8] sm:$0xff] %v321
                %v323 = vld [vmem:[%s273 + $0x140] sm:$0xff]
                %324 = vst [vmem:[%s274 + $0xc0] sm:$0xff] %v323
                %v325 = vld [vmem:[%s273 + $0x148] sm:$0xff]
                %326 = vst [vmem:[%s274 + $0xc8] sm:$0xff] %v325
                %v327 = vld [vmem:[%s273 + $0x150] sm:$0xff]
                %328 = vst [vmem:[%s274 + $0xd0] sm:$0xff] %v327
                %v329 = vld [vmem:[%s273 + $0x158] sm:$0xff]
                %330 = vst [vmem:[%s274 + $0xd8] sm:$0xff] %v329
                %v331 = vld [vmem:[%s273 + $0x160] sm:$0xff]
                %332 = vst [vmem:[%s274 + $0xe0] sm:$0xff] %v331
                %v333 = vld [vmem:[%s273 + $0x168] sm:$0xff]
                %334 = vst [vmem:[%s274 + $0xe8] sm:$0xff] %v333
                %v335 = vld [vmem:[%s273 + $0x170] sm:$0xff]
                %336 = vst [vmem:[%s274 + $0xf0] sm:$0xff] %v335
                %v337 = vld [vmem:[%s273 + $0x178] sm:$0xff]
                %338 = vst [vmem:[%s274 + $0xf8] sm:$0xff] %v337
                %v339 = vld [vmem:[%s273 + $0x200] sm:$0xff]
                %340 = vst [vmem:[%s274 + $0x100] sm:$0xff] %v339
                %v341 = vld [vmem:[%s273 + $0x208] sm:$0xff]
                %342 = vst [vmem:[%s274 + $0x108] sm:$0xff] %v341
                %v343 = vld [vmem:[%s273 + $0x210] sm:$0xff]
                %344 = vst [vmem:[%s274 + $0x110] sm:$0xff] %v343
                %v345 = vld [vmem:[%s273 + $0x218] sm:$0xff]
                %346 = vst [vmem:[%s274 + $0x118] sm:$0xff] %v345
                %v347 = vld [vmem:[%s273 + $0x220] sm:$0xff]
                %348 = vst [vmem:[%s274 + $0x120] sm:$0xff] %v347
                %v349 = vld [vmem:[%s273 + $0x228] sm:$0xff]
                %350 = vst [vmem:[%s274 + $0x128] sm:$0xff] %v349
                %v351 = vld [vmem:[%s273 + $0x230] sm:$0xff]
                %352 = vst [vmem:[%s274 + $0x130] sm:$0xff] %v351
                %v353 = vld [vmem:[%s273 + $0x238] sm:$0xff]
                %354 = vst [vmem:[%s274 + $0x138] sm:$0xff] %v353
                %v355 = vld [vmem:[%s273 + $0x240] sm:$0xff]
                %356 = vst [vmem:[%s274 + $0x140] sm:$0xff] %v355
                %v357 = vld [vmem:[%s273 + $0x248] sm:$0xff]
                %358 = vst [vmem:[%s274 + $0x148] sm:$0xff] %v357
                %v359 = vld [vmem:[%s273 + $0x250] sm:$0xff]
                %360 = vst [vmem:[%s274 + $0x150] sm:$0xff] %v359
                %v361 = vld [vmem:[%s273 + $0x258] sm:$0xff]
                %362 = vst [vmem:[%s274 + $0x158] sm:$0xff] %v361
                %v363 = vld [vmem:[%s273 + $0x260] sm:$0xff]
                %364 = vst [vmem:[%s274 + $0x160] sm:$0xff] %v363
                %v365 = vld [vmem:[%s273 + $0x268] sm:$0xff]
                %366 = vst [vmem:[%s274 + $0x168] sm:$0xff] %v365
                %v367 = vld [vmem:[%s273 + $0x270] sm:$0xff]
                %368 = vst [vmem:[%s274 + $0x170] sm:$0xff] %v367
                %v369 = vld [vmem:[%s273 + $0x278] sm:$0xff]
                %370 = vst [vmem:[%s274 + $0x178] sm:$0xff] %v369
                %v371 = vld [vmem:[%s273 + $0x300] sm:$0xff]
                %372 = vst [vmem:[%s274 + $0x180] sm:$0xff] %v371
                %v373 = vld [vmem:[%s273 + $0x308] sm:$0xff]
                %374 = vst [vmem:[%s274 + $0x188] sm:$0xff] %v373
                %v375 = vld [vmem:[%s273 + $0x310] sm:$0xff]
                %376 = vst [vmem:[%s274 + $0x190] sm:$0xff] %v375
                %v377 = vld [vmem:[%s273 + $0x318] sm:$0xff]
                %378 = vst [vmem:[%s274 + $0x198] sm:$0xff] %v377
                %v379 = vld [vmem:[%s273 + $0x320] sm:$0xff]
                %380 = vst [vmem:[%s274 + $0x1a0] sm:$0xff] %v379
                %v381 = vld [vmem:[%s273 + $0x328] sm:$0xff]
                %382 = vst [vmem:[%s274 + $0x1a8] sm:$0xff] %v381
                %v383 = vld [vmem:[%s273 + $0x330] sm:$0xff]
                %384 = vst [vmem:[%s274 + $0x1b0] sm:$0xff] %v383
                %v385 = vld [vmem:[%s273 + $0x338] sm:$0xff]
                %386 = vst [vmem:[%s274 + $0x1b8] sm:$0xff] %v385
                %v387 = vld [vmem:[%s273 + $0x340] sm:$0xff]
                %388 = vst [vmem:[%s274 + $0x1c0] sm:$0xff] %v387
                %v389 = vld [vmem:[%s273 + $0x348] sm:$0xff]
                %390 = vst [vmem:[%s274 + $0x1c8] sm:$0xff] %v389
                %v391 = vld [vmem:[%s273 + $0x350] sm:$0xff]
                %392 = vst [vmem:[%s274 + $0x1d0] sm:$0xff] %v391
                %v393 = vld [vmem:[%s273 + $0x358] sm:$0xff]
                %394 = vst [vmem:[%s274 + $0x1d8] sm:$0xff] %v393
                %v395 = vld [vmem:[%s273 + $0x360] sm:$0xff]
                %396 = vst [vmem:[%s274 + $0x1e0] sm:$0xff] %v395
                %v397 = vld [vmem:[%s273 + $0x368] sm:$0xff]
                %398 = vst [vmem:[%s274 + $0x1e8] sm:$0xff] %v397
                %v399 = vld [vmem:[%s273 + $0x370] sm:$0xff]
                %400 = vst [vmem:[%s274 + $0x1f0] sm:$0xff] %v399
                %v401 = vld [vmem:[%s273 + $0x378] sm:$0xff]
                %402 = vst [vmem:[%s274 + $0x1f8] sm:$0xff] %v401
              $region75: #{tpu_custom_call.1} parent=69 // loop_footer
                %s272 = sadd.s32 1, %s268
              $region76: #{tpu_custom_call.1} parent=69 // loop_footer_branch
                %267 = sbr.rel target = $region72
              $region77: #{tpu_custom_call.1} parent=69 // loop_exit
                _
            $region70: #{tpu_custom_call.1} parent=61 // pred_fallthru
              _
          $region62: #{tpu_custom_call.1} parent=57 // pred_fallthru
            _
          %543 = vnop
        $region58: #{tpu_custom_call.1} parent=15 // pred_fallthru
          _
        // Predicated region
        $region93: #{tpu_custom_call.1} parent=15 // pred_check
          %p544 = pneg %p117
        $region94: #{tpu_custom_call.1} parent=15 // pred_check_branch
          %546 = sbr.rel (%p544) target = $region96
        $region95: #{tpu_custom_call.1} parent=15 // pred_region
          %s547 = sand.u32 %s107, 1
          %s548 = sand.u32 %s107, 1
          %s549 = smul.addr %s548, 512
          %s550 = scalar_lea.vmem [#allocation6], %s549
          %p551 = scmp.eq.s32.totalorder %s20, 0
          %s552 = scalar_select %p551, %s21, 1
          %s553 = smul.u32 16, %s552
          %s554 = smul.addr %s553, 8
          %s555 = scalar_lea.vmem %s2, %s554
          // Predicated region
          $region97: #{tpu_custom_call.1} parent=95 // pred_check
            _
          $region98: #{tpu_custom_call.1} parent=95 // pred_check_branch
            %557 = sbr.rel (0) target = $region100
          $region99: #{tpu_custom_call.1} parent=95 // pred_region
            // Predicated region
            $region101: #{tpu_custom_call.1} parent=99 // pred_check
              _
            $region102: #{tpu_custom_call.1} parent=99 // pred_check_branch
              %559 = sbr.rel (0) target = $region104
            $region103: #{tpu_custom_call.1} parent=99 // pred_region
              // Predicated region
              $region116: #{tpu_custom_call.1} parent=103 // pred_check
                _
              $region117: #{tpu_custom_call.1} parent=103 // pred_check_branch
                %700 = sbr.rel (0) target = $region119
              $region118: #{tpu_custom_call.1} parent=103 // pred_region
                loop: start=0, step=1, limit=1
                $region120: #{tpu_custom_call.1} parent=118 // loop_pre_header
                  _
                $region121: #{tpu_custom_call.1} parent=118 // loop_header
                  %s702 = sphi 0, %s706
                  %p703 = scmp.ge.s32.totalorder %s702, 1
                  %s707 = sphi %s555, %s555
                  %s708 = sphi %s550, %s550
                $region122: #{tpu_custom_call.1} parent=118 // loop_header_branch
                  %705 = sbr.rel (%p703) target = $region126
                $region123: #{tpu_custom_call.1} parent=118 // loop_body
                  %v709 = vld [vmem:[%s707] sm:$0xff]
                  %710 = vst [vmem:[%s708] sm:$0xff] %v709
                  %v711 = vld [vmem:[%s707 + $0x8] sm:$0xff]
                  %712 = vst [vmem:[%s708 + $0x8] sm:$0xff] %v711
                  %v713 = vld [vmem:[%s707 + $0x10] sm:$0xff]
                  %714 = vst [vmem:[%s708 + $0x10] sm:$0xff] %v713
                  %v715 = vld [vmem:[%s707 + $0x18] sm:$0xff]
                  %716 = vst [vmem:[%s708 + $0x18] sm:$0xff] %v715
                  %v717 = vld [vmem:[%s707 + $0x20] sm:$0xff]
                  %718 = vst [vmem:[%s708 + $0x20] sm:$0xff] %v717
                  %v719 = vld [vmem:[%s707 + $0x28] sm:$0xff]
                  %720 = vst [vmem:[%s708 + $0x28] sm:$0xff] %v719
                  %v721 = vld [vmem:[%s707 + $0x30] sm:$0xff]
                  %722 = vst [vmem:[%s708 + $0x30] sm:$0xff] %v721
                  %v723 = vld [vmem:[%s707 + $0x38] sm:$0xff]
                  %724 = vst [vmem:[%s708 + $0x38] sm:$0xff] %v723
                  %v725 = vld [vmem:[%s707 + $0x40] sm:$0xff]
                  %726 = vst [vmem:[%s708 + $0x40] sm:$0xff] %v725
                  %v727 = vld [vmem:[%s707 + $0x48] sm:$0xff]
                  %728 = vst [vmem:[%s708 + $0x48] sm:$0xff] %v727
                  %v729 = vld [vmem:[%s707 + $0x50] sm:$0xff]
                  %730 = vst [vmem:[%s708 + $0x50] sm:$0xff] %v729
                  %v731 = vld [vmem:[%s707 + $0x58] sm:$0xff]
                  %732 = vst [vmem:[%s708 + $0x58] sm:$0xff] %v731
                  %v733 = vld [vmem:[%s707 + $0x60] sm:$0xff]
                  %734 = vst [vmem:[%s708 + $0x60] sm:$0xff] %v733
                  %v735 = vld [vmem:[%s707 + $0x68] sm:$0xff]
                  %736 = vst [vmem:[%s708 + $0x68] sm:$0xff] %v735
                  %v737 = vld [vmem:[%s707 + $0x70] sm:$0xff]
                  %738 = vst [vmem:[%s708 + $0x70] sm:$0xff] %v737
                  %v739 = vld [vmem:[%s707 + $0x78] sm:$0xff]
                  %740 = vst [vmem:[%s708 + $0x78] sm:$0xff] %v739
                  %v741 = vld [vmem:[%s707 + $0x100] sm:$0xff]
                  %742 = vst [vmem:[%s708 + $0x80] sm:$0xff] %v741
                  %v743 = vld [vmem:[%s707 + $0x108] sm:$0xff]
                  %744 = vst [vmem:[%s708 + $0x88] sm:$0xff] %v743
                  %v745 = vld [vmem:[%s707 + $0x110] sm:$0xff]
                  %746 = vst [vmem:[%s708 + $0x90] sm:$0xff] %v745
                  %v747 = vld [vmem:[%s707 + $0x118] sm:$0xff]
                  %748 = vst [vmem:[%s708 + $0x98] sm:$0xff] %v747
                  %v749 = vld [vmem:[%s707 + $0x120] sm:$0xff]
                  %750 = vst [vmem:[%s708 + $0xa0] sm:$0xff] %v749
                  %v751 = vld [vmem:[%s707 + $0x128] sm:$0xff]
                  %752 = vst [vmem:[%s708 + $0xa8] sm:$0xff] %v751
                  %v753 = vld [vmem:[%s707 + $0x130] sm:$0xff]
                  %754 = vst [vmem:[%s708 + $0xb0] sm:$0xff] %v753
                  %v755 = vld [vmem:[%s707 + $0x138] sm:$0xff]
                  %756 = vst [vmem:[%s708 + $0xb8] sm:$0xff] %v755
                  %v757 = vld [vmem:[%s707 + $0x140] sm:$0xff]
                  %758 = vst [vmem:[%s708 + $0xc0] sm:$0xff] %v757
                  %v759 = vld [vmem:[%s707 + $0x148] sm:$0xff]
                  %760 = vst [vmem:[%s708 + $0xc8] sm:$0xff] %v759
                  %v761 = vld [vmem:[%s707 + $0x150] sm:$0xff]
                  %762 = vst [vmem:[%s708 + $0xd0] sm:$0xff] %v761
                  %v763 = vld [vmem:[%s707 + $0x158] sm:$0xff]
                  %764 = vst [vmem:[%s708 + $0xd8] sm:$0xff] %v763
                  %v765 = vld [vmem:[%s707 + $0x160] sm:$0xff]
                  %766 = vst [vmem:[%s708 + $0xe0] sm:$0xff] %v765
                  %v767 = vld [vmem:[%s707 + $0x168] sm:$0xff]
                  %768 = vst [vmem:[%s708 + $0xe8] sm:$0xff] %v767
                  %v769 = vld [vmem:[%s707 + $0x170] sm:$0xff]
                  %770 = vst [vmem:[%s708 + $0xf0] sm:$0xff] %v769
                  %v771 = vld [vmem:[%s707 + $0x178] sm:$0xff]
                  %772 = vst [vmem:[%s708 + $0xf8] sm:$0xff] %v771
                  %v773 = vld [vmem:[%s707 + $0x200] sm:$0xff]
                  %774 = vst [vmem:[%s708 + $0x100] sm:$0xff] %v773
                  %v775 = vld [vmem:[%s707 + $0x208] sm:$0xff]
                  %776 = vst [vmem:[%s708 + $0x108] sm:$0xff] %v775
                  %v777 = vld [vmem:[%s707 + $0x210] sm:$0xff]
                  %778 = vst [vmem:[%s708 + $0x110] sm:$0xff] %v777
                  %v779 = vld [vmem:[%s707 + $0x218] sm:$0xff]
                  %780 = vst [vmem:[%s708 + $0x118] sm:$0xff] %v779
                  %v781 = vld [vmem:[%s707 + $0x220] sm:$0xff]
                  %782 = vst [vmem:[%s708 + $0x120] sm:$0xff] %v781
                  %v783 = vld [vmem:[%s707 + $0x228] sm:$0xff]
                  %784 = vst [vmem:[%s708 + $0x128] sm:$0xff] %v783
                  %v785 = vld [vmem:[%s707 + $0x230] sm:$0xff]
                  %786 = vst [vmem:[%s708 + $0x130] sm:$0xff] %v785
                  %v787 = vld [vmem:[%s707 + $0x238] sm:$0xff]
                  %788 = vst [vmem:[%s708 + $0x138] sm:$0xff] %v787
                  %v789 = vld [vmem:[%s707 + $0x240] sm:$0xff]
                  %790 = vst [vmem:[%s708 + $0x140] sm:$0xff] %v789
                  %v791 = vld [vmem:[%s707 + $0x248] sm:$0xff]
                  %792 = vst [vmem:[%s708 + $0x148] sm:$0xff] %v791
                  %v793 = vld [vmem:[%s707 + $0x250] sm:$0xff]
                  %794 = vst [vmem:[%s708 + $0x150] sm:$0xff] %v793
                  %v795 = vld [vmem:[%s707 + $0x258] sm:$0xff]
                  %796 = vst [vmem:[%s708 + $0x158] sm:$0xff] %v795
                  %v797 = vld [vmem:[%s707 + $0x260] sm:$0xff]
                  %798 = vst [vmem:[%s708 + $0x160] sm:$0xff] %v797
                  %v799 = vld [vmem:[%s707 + $0x268] sm:$0xff]
                  %800 = vst [vmem:[%s708 + $0x168] sm:$0xff] %v799
                  %v801 = vld [vmem:[%s707 + $0x270] sm:$0xff]
                  %802 = vst [vmem:[%s708 + $0x170] sm:$0xff] %v801
                  %v803 = vld [vmem:[%s707 + $0x278] sm:$0xff]
                  %804 = vst [vmem:[%s708 + $0x178] sm:$0xff] %v803
                  %v805 = vld [vmem:[%s707 + $0x300] sm:$0xff]
                  %806 = vst [vmem:[%s708 + $0x180] sm:$0xff] %v805
                  %v807 = vld [vmem:[%s707 + $0x308] sm:$0xff]
                  %808 = vst [vmem:[%s708 + $0x188] sm:$0xff] %v807
                  %v809 = vld [vmem:[%s707 + $0x310] sm:$0xff]
                  %810 = vst [vmem:[%s708 + $0x190] sm:$0xff] %v809
                  %v811 = vld [vmem:[%s707 + $0x318] sm:$0xff]
                  %812 = vst [vmem:[%s708 + $0x198] sm:$0xff] %v811
                  %v813 = vld [vmem:[%s707 + $0x320] sm:$0xff]
                  %814 = vst [vmem:[%s708 + $0x1a0] sm:$0xff] %v813
                  %v815 = vld [vmem:[%s707 + $0x328] sm:$0xff]
                  %816 = vst [vmem:[%s708 + $0x1a8] sm:$0xff] %v815
                  %v817 = vld [vmem:[%s707 + $0x330] sm:$0xff]
                  %818 = vst [vmem:[%s708 + $0x1b0] sm:$0xff] %v817
                  %v819 = vld [vmem:[%s707 + $0x338] sm:$0xff]
                  %820 = vst [vmem:[%s708 + $0x1b8] sm:$0xff] %v819
                  %v821 = vld [vmem:[%s707 + $0x340] sm:$0xff]
                  %822 = vst [vmem:[%s708 + $0x1c0] sm:$0xff] %v821
                  %v823 = vld [vmem:[%s707 + $0x348] sm:$0xff]
                  %824 = vst [vmem:[%s708 + $0x1c8] sm:$0xff] %v823
                  %v825 = vld [vmem:[%s707 + $0x350] sm:$0xff]
                  %826 = vst [vmem:[%s708 + $0x1d0] sm:$0xff] %v825
                  %v827 = vld [vmem:[%s707 + $0x358] sm:$0xff]
                  %828 = vst [vmem:[%s708 + $0x1d8] sm:$0xff] %v827
                  %v829 = vld [vmem:[%s707 + $0x360] sm:$0xff]
                  %830 = vst [vmem:[%s708 + $0x1e0] sm:$0xff] %v829
                  %v831 = vld [vmem:[%s707 + $0x368] sm:$0xff]
                  %832 = vst [vmem:[%s708 + $0x1e8] sm:$0xff] %v831
                  %v833 = vld [vmem:[%s707 + $0x370] sm:$0xff]
                  %834 = vst [vmem:[%s708 + $0x1f0] sm:$0xff] %v833
                  %v835 = vld [vmem:[%s707 + $0x378] sm:$0xff]
                  %836 = vst [vmem:[%s708 + $0x1f8] sm:$0xff] %v835
                $region124: #{tpu_custom_call.1} parent=118 // loop_footer
                  %s706 = sadd.s32 1, %s702
                $region125: #{tpu_custom_call.1} parent=118 // loop_footer_branch
                  %701 = sbr.rel target = $region121
                $region126: #{tpu_custom_call.1} parent=118 // loop_exit
                  _
              $region119: #{tpu_custom_call.1} parent=103 // pred_fallthru
                _
              // Predicated region
              $region127: #{tpu_custom_call.1} parent=103 // pred_check
                _
              $region128: #{tpu_custom_call.1} parent=103 // pred_check_branch
                %838 = sbr.rel target = $region130
              $region129: #{tpu_custom_call.1} parent=103 // pred_region
                _
              $region130: #{tpu_custom_call.1} parent=103 // pred_fallthru
                _
            $region104: #{tpu_custom_call.1} parent=99 // pred_fallthru
              _
            // Predicated region
            $region105: #{tpu_custom_call.1} parent=99 // pred_check
              _
            $region106: #{tpu_custom_call.1} parent=99 // pred_check_branch
              %561 = sbr.rel target = $region108
            $region107: #{tpu_custom_call.1} parent=99 // pred_region
              loop: start=0, step=1, limit=1
              $region109: #{tpu_custom_call.1} parent=107 // loop_pre_header
                _
              $region110: #{tpu_custom_call.1} parent=107 // loop_header
                %s564 = sphi 0, %s568
                %p565 = scmp.ge.s32.totalorder %s564, 1
                %s569 = sphi %s555, %s555
                %s570 = sphi %s550, %s550
              $region111: #{tpu_custom_call.1} parent=107 // loop_header_branch
                %567 = sbr.rel (%p565) target = $region115
              $region112: #{tpu_custom_call.1} parent=107 // loop_body
                %v571 = vld [vmem:[%s569] sm:$0xff]
                %572 = vst [vmem:[%s570] sm:$0xff] %v571
                %v573 = vld [vmem:[%s569 + $0x8] sm:$0xff]
                %574 = vst [vmem:[%s570 + $0x8] sm:$0xff] %v573
                %v575 = vld [vmem:[%s569 + $0x10] sm:$0xff]
                %576 = vst [vmem:[%s570 + $0x10] sm:$0xff] %v575
                %v577 = vld [vmem:[%s569 + $0x18] sm:$0xff]
                %578 = vst [vmem:[%s570 + $0x18] sm:$0xff] %v577
                %v579 = vld [vmem:[%s569 + $0x20] sm:$0xff]
                %580 = vst [vmem:[%s570 + $0x20] sm:$0xff] %v579
                %v581 = vld [vmem:[%s569 + $0x28] sm:$0xff]
                %582 = vst [vmem:[%s570 + $0x28] sm:$0xff] %v581
                %v583 = vld [vmem:[%s569 + $0x30] sm:$0xff]
                %584 = vst [vmem:[%s570 + $0x30] sm:$0xff] %v583
                %v585 = vld [vmem:[%s569 + $0x38] sm:$0xff]
                %586 = vst [vmem:[%s570 + $0x38] sm:$0xff] %v585
                %v587 = vld [vmem:[%s569 + $0x40] sm:$0xff]
                %588 = vst [vmem:[%s570 + $0x40] sm:$0xff] %v587
                %v589 = vld [vmem:[%s569 + $0x48] sm:$0xff]
                %590 = vst [vmem:[%s570 + $0x48] sm:$0xff] %v589
                %v591 = vld [vmem:[%s569 + $0x50] sm:$0xff]
                %592 = vst [vmem:[%s570 + $0x50] sm:$0xff] %v591
                %v593 = vld [vmem:[%s569 + $0x58] sm:$0xff]
                %594 = vst [vmem:[%s570 + $0x58] sm:$0xff] %v593
                %v595 = vld [vmem:[%s569 + $0x60] sm:$0xff]
                %596 = vst [vmem:[%s570 + $0x60] sm:$0xff] %v595
                %v597 = vld [vmem:[%s569 + $0x68] sm:$0xff]
                %598 = vst [vmem:[%s570 + $0x68] sm:$0xff] %v597
                %v599 = vld [vmem:[%s569 + $0x70] sm:$0xff]
                %600 = vst [vmem:[%s570 + $0x70] sm:$0xff] %v599
                %v601 = vld [vmem:[%s569 + $0x78] sm:$0xff]
                %602 = vst [vmem:[%s570 + $0x78] sm:$0xff] %v601
                %v603 = vld [vmem:[%s569 + $0x100] sm:$0xff]
                %604 = vst [vmem:[%s570 + $0x80] sm:$0xff] %v603
                %v605 = vld [vmem:[%s569 + $0x108] sm:$0xff]
                %606 = vst [vmem:[%s570 + $0x88] sm:$0xff] %v605
                %v607 = vld [vmem:[%s569 + $0x110] sm:$0xff]
                %608 = vst [vmem:[%s570 + $0x90] sm:$0xff] %v607
                %v609 = vld [vmem:[%s569 + $0x118] sm:$0xff]
                %610 = vst [vmem:[%s570 + $0x98] sm:$0xff] %v609
                %v611 = vld [vmem:[%s569 + $0x120] sm:$0xff]
                %612 = vst [vmem:[%s570 + $0xa0] sm:$0xff] %v611
                %v613 = vld [vmem:[%s569 + $0x128] sm:$0xff]
                %614 = vst [vmem:[%s570 + $0xa8] sm:$0xff] %v613
                %v615 = vld [vmem:[%s569 + $0x130] sm:$0xff]
                %616 = vst [vmem:[%s570 + $0xb0] sm:$0xff] %v615
                %v617 = vld [vmem:[%s569 + $0x138] sm:$0xff]
                %618 = vst [vmem:[%s570 + $0xb8] sm:$0xff] %v617
                %v619 = vld [vmem:[%s569 + $0x140] sm:$0xff]
                %620 = vst [vmem:[%s570 + $0xc0] sm:$0xff] %v619
                %v621 = vld [vmem:[%s569 + $0x148] sm:$0xff]
                %622 = vst [vmem:[%s570 + $0xc8] sm:$0xff] %v621
                %v623 = vld [vmem:[%s569 + $0x150] sm:$0xff]
                %624 = vst [vmem:[%s570 + $0xd0] sm:$0xff] %v623
                %v625 = vld [vmem:[%s569 + $0x158] sm:$0xff]
                %626 = vst [vmem:[%s570 + $0xd8] sm:$0xff] %v625
                %v627 = vld [vmem:[%s569 + $0x160] sm:$0xff]
                %628 = vst [vmem:[%s570 + $0xe0] sm:$0xff] %v627
                %v629 = vld [vmem:[%s569 + $0x168] sm:$0xff]
                %630 = vst [vmem:[%s570 + $0xe8] sm:$0xff] %v629
                %v631 = vld [vmem:[%s569 + $0x170] sm:$0xff]
                %632 = vst [vmem:[%s570 + $0xf0] sm:$0xff] %v631
                %v633 = vld [vmem:[%s569 + $0x178] sm:$0xff]
                %634 = vst [vmem:[%s570 + $0xf8] sm:$0xff] %v633
                %v635 = vld [vmem:[%s569 + $0x200] sm:$0xff]
                %636 = vst [vmem:[%s570 + $0x100] sm:$0xff] %v635
                %v637 = vld [vmem:[%s569 + $0x208] sm:$0xff]
                %638 = vst [vmem:[%s570 + $0x108] sm:$0xff] %v637
                %v639 = vld [vmem:[%s569 + $0x210] sm:$0xff]
                %640 = vst [vmem:[%s570 + $0x110] sm:$0xff] %v639
                %v641 = vld [vmem:[%s569 + $0x218] sm:$0xff]
                %642 = vst [vmem:[%s570 + $0x118] sm:$0xff] %v641
                %v643 = vld [vmem:[%s569 + $0x220] sm:$0xff]
                %644 = vst [vmem:[%s570 + $0x120] sm:$0xff] %v643
                %v645 = vld [vmem:[%s569 + $0x228] sm:$0xff]
                %646 = vst [vmem:[%s570 + $0x128] sm:$0xff] %v645
                %v647 = vld [vmem:[%s569 + $0x230] sm:$0xff]
                %648 = vst [vmem:[%s570 + $0x130] sm:$0xff] %v647
                %v649 = vld [vmem:[%s569 + $0x238] sm:$0xff]
                %650 = vst [vmem:[%s570 + $0x138] sm:$0xff] %v649
                %v651 = vld [vmem:[%s569 + $0x240] sm:$0xff]
                %652 = vst [vmem:[%s570 + $0x140] sm:$0xff] %v651
                %v653 = vld [vmem:[%s569 + $0x248] sm:$0xff]
                %654 = vst [vmem:[%s570 + $0x148] sm:$0xff] %v653
                %v655 = vld [vmem:[%s569 + $0x250] sm:$0xff]
                %656 = vst [vmem:[%s570 + $0x150] sm:$0xff] %v655
                %v657 = vld [vmem:[%s569 + $0x258] sm:$0xff]
                %658 = vst [vmem:[%s570 + $0x158] sm:$0xff] %v657
                %v659 = vld [vmem:[%s569 + $0x260] sm:$0xff]
                %660 = vst [vmem:[%s570 + $0x160] sm:$0xff] %v659
                %v661 = vld [vmem:[%s569 + $0x268] sm:$0xff]
                %662 = vst [vmem:[%s570 + $0x168] sm:$0xff] %v661
                %v663 = vld [vmem:[%s569 + $0x270] sm:$0xff]
                %664 = vst [vmem:[%s570 + $0x170] sm:$0xff] %v663
                %v665 = vld [vmem:[%s569 + $0x278] sm:$0xff]
                %666 = vst [vmem:[%s570 + $0x178] sm:$0xff] %v665
                %v667 = vld [vmem:[%s569 + $0x300] sm:$0xff]
                %668 = vst [vmem:[%s570 + $0x180] sm:$0xff] %v667
                %v669 = vld [vmem:[%s569 + $0x308] sm:$0xff]
                %670 = vst [vmem:[%s570 + $0x188] sm:$0xff] %v669
                %v671 = vld [vmem:[%s569 + $0x310] sm:$0xff]
                %672 = vst [vmem:[%s570 + $0x190] sm:$0xff] %v671
                %v673 = vld [vmem:[%s569 + $0x318] sm:$0xff]
                %674 = vst [vmem:[%s570 + $0x198] sm:$0xff] %v673
                %v675 = vld [vmem:[%s569 + $0x320] sm:$0xff]
                %676 = vst [vmem:[%s570 + $0x1a0] sm:$0xff] %v675
                %v677 = vld [vmem:[%s569 + $0x328] sm:$0xff]
                %678 = vst [vmem:[%s570 + $0x1a8] sm:$0xff] %v677
                %v679 = vld [vmem:[%s569 + $0x330] sm:$0xff]
                %680 = vst [vmem:[%s570 + $0x1b0] sm:$0xff] %v679
                %v681 = vld [vmem:[%s569 + $0x338] sm:$0xff]
                %682 = vst [vmem:[%s570 + $0x1b8] sm:$0xff] %v681
                %v683 = vld [vmem:[%s569 + $0x340] sm:$0xff]
                %684 = vst [vmem:[%s570 + $0x1c0] sm:$0xff] %v683
                %v685 = vld [vmem:[%s569 + $0x348] sm:$0xff]
                %686 = vst [vmem:[%s570 + $0x1c8] sm:$0xff] %v685
                %v687 = vld [vmem:[%s569 + $0x350] sm:$0xff]
                %688 = vst [vmem:[%s570 + $0x1d0] sm:$0xff] %v687
                %v689 = vld [vmem:[%s569 + $0x358] sm:$0xff]
                %690 = vst [vmem:[%s570 + $0x1d8] sm:$0xff] %v689
                %v691 = vld [vmem:[%s569 + $0x360] sm:$0xff]
                %692 = vst [vmem:[%s570 + $0x1e0] sm:$0xff] %v691
                %v693 = vld [vmem:[%s569 + $0x368] sm:$0xff]
                %694 = vst [vmem:[%s570 + $0x1e8] sm:$0xff] %v693
                %v695 = vld [vmem:[%s569 + $0x370] sm:$0xff]
                %696 = vst [vmem:[%s570 + $0x1f0] sm:$0xff] %v695
                %v697 = vld [vmem:[%s569 + $0x378] sm:$0xff]
                %698 = vst [vmem:[%s570 + $0x1f8] sm:$0xff] %v697
              $region113: #{tpu_custom_call.1} parent=107 // loop_footer
                %s568 = sadd.s32 1, %s564
              $region114: #{tpu_custom_call.1} parent=107 // loop_footer_branch
                %563 = sbr.rel target = $region110
              $region115: #{tpu_custom_call.1} parent=107 // loop_exit
                _
            $region108: #{tpu_custom_call.1} parent=99 // pred_fallthru
              _
          $region100: #{tpu_custom_call.1} parent=95 // pred_fallthru
            _
          %839 = vnop
        $region96: #{tpu_custom_call.1} parent=15 // pred_fallthru
          _
      $region16: #{tpu_custom_call.1} parent=5 // pred_fallthru
        _
      %p840 = scmp.le.s32.totalorder 1, %s12
      %p841 = scmp.lt.s32.totalorder %s12, 9
      %p842 = pnand %p840, %p841
      %p843 = pneg %p842
      // Predicated region
      $region131: #{tpu_custom_call.1} parent=5 // pred_check
        _
      $region132: #{tpu_custom_call.1} parent=5 // pred_check_branch
        %845 = sbr.rel (%p842) target = $region134
      $region133: #{tpu_custom_call.1} parent=5 // pred_region
        %s846 = ssub.s32 %s12, 1
        %s847 = sand.u32 %s48, 1
        %s848 = sand.u32 %s48, 1
        %s849 = smul.addr %s848, 64
        %s850 = scalar_lea.vmem [#allocation4], %s849
        // Predicated region
        $region135: #{tpu_custom_call.1} parent=133 // pred_check
          %p851 = pneg %p61
        $region136: #{tpu_custom_call.1} parent=133 // pred_check_branch
          %853 = sbr.rel (%p851) target = $region138
        $region137: #{tpu_custom_call.1} parent=133 // pred_region
          _
        $region138: #{tpu_custom_call.1} parent=133 // pred_fallthru
          _
        %s854 = sand.u32 %s80, 1
        %s855 = sand.u32 %s80, 1
        %s856 = smul.addr %s855, 512
        %s857 = scalar_lea.vmem [#allocation5], %s856
        // Predicated region
        $region139: #{tpu_custom_call.1} parent=133 // pred_check
          %p858 = pneg %p93
        $region140: #{tpu_custom_call.1} parent=133 // pred_check_branch
          %860 = sbr.rel (%p858) target = $region142
        $region141: #{tpu_custom_call.1} parent=133 // pred_region
          _
        $region142: #{tpu_custom_call.1} parent=133 // pred_fallthru
          _
        %s861 = sand.u32 %s110, 1
        %s862 = sand.u32 %s110, 1
        %s863 = smul.addr %s862, 512
        %s864 = scalar_lea.vmem [#allocation6], %s863
        // Predicated region
        $region143: #{tpu_custom_call.1} parent=133 // pred_check
          %p865 = pneg %p123
        $region144: #{tpu_custom_call.1} parent=133 // pred_check_branch
          %867 = sbr.rel (%p865) target = $region146
        $region145: #{tpu_custom_call.1} parent=133 // pred_region
          _
        $region146: #{tpu_custom_call.1} parent=133 // pred_fallthru
          _
        %s868 = sand.u32 %s48, 1
        %s869 = sand.u32 %s48, 1
        %s870 = smul.addr %s869, 64
        %s871 = scalar_lea.vmem [#allocation4], %s870
        %p872 = pneg %p61
        %p873 = pneg %p58
        %s874 = sand.u32 %s80, 1
        %s875 = sand.u32 %s80, 1
        %s876 = smul.addr %s875, 512
        %s877 = scalar_lea.vmem [#allocation5], %s876
        %p878 = pneg %p93
        %p879 = pneg %p90
        %s880 = sand.u32 %s110, 1
        %s881 = sand.u32 %s110, 1
        %s882 = smul.addr %s881, 512
        %s883 = scalar_lea.vmem [#allocation6], %s882
        %p884 = pneg %p123
        %p885 = pneg %p120
        %p886 = pneg %p151
        %p887 = pneg %p148
        %s888 = sand.u32 %s138, 1
        %s889 = scalar_lea.sflag [#allocation8], %s888
        %s890 = sand.u32 %s138, 1
        %s891 = smul.addr %s890, 64
        %s892 = scalar_lea.vmem [#allocation7], %s891
        %s893 = smul.u32 4, %s22
        %s894 = smul.u32 2, %s23
        %p895 = scmp.eq.s32.totalorder %s23, 0
        %s896 = scalar_select %p895, %s24, 1
        %s897 = smul.u32 4, %s22
        %s898 = smul.u32 16, %s896
        %p899 = scmp.eq.s32.totalorder %s23, 0
        %s900 = scalar_select %p899, %s24, 1
        %s901 = smul.u32 16, %s900
        %s902 = smul.u32 4, %s22
        %s903 = smul.u32 2, %s23
        %p905 = scmp.eq.s32.totalorder %s23, 0
        // Predicated region
        $region147: #{tpu_custom_call.1} parent=133 // pred_check
          %p906 = pneg %p905
        $region148: #{tpu_custom_call.1} parent=133 // pred_check_branch
          %908 = sbr.rel (%p906) target = $region150
        $region149: #{tpu_custom_call.1} parent=133 // pred_region
          %v909 = vld [vmem:[%s857] sm:$0xff]
          %v910 = vld [vmem:[%s857 + $0x8] sm:$0xff]
          %v911 = vld [vmem:[%s857 + $0x10] sm:$0xff]
          %v912 = vld [vmem:[%s857 + $0x18] sm:$0xff]
          %v913 = vld [vmem:[%s857 + $0x20] sm:$0xff]
          %v914 = vld [vmem:[%s857 + $0x28] sm:$0xff]
          %v915 = vld [vmem:[%s857 + $0x30] sm:$0xff]
          %v916 = vld [vmem:[%s857 + $0x38] sm:$0xff]
          %v917 = vld [vmem:[%s857 + $0x40] sm:$0xff]
          %v918 = vld [vmem:[%s857 + $0x48] sm:$0xff]
          %v919 = vld [vmem:[%s857 + $0x50] sm:$0xff]
          %v920 = vld [vmem:[%s857 + $0x58] sm:$0xff]
          %v921 = vld [vmem:[%s857 + $0x60] sm:$0xff]
          %v922 = vld [vmem:[%s857 + $0x68] sm:$0xff]
          %v923 = vld [vmem:[%s857 + $0x70] sm:$0xff]
          %v924 = vld [vmem:[%s857 + $0x78] sm:$0xff]
          %v925 = vld [vmem:[%s857 + $0x80] sm:$0xff]
          %v926 = vld [vmem:[%s857 + $0x88] sm:$0xff]
          %v927 = vld [vmem:[%s857 + $0x90] sm:$0xff]
          %v928 = vld [vmem:[%s857 + $0x98] sm:$0xff]
          %v929 = vld [vmem:[%s857 + $0xa0] sm:$0xff]
          %v930 = vld [vmem:[%s857 + $0xa8] sm:$0xff]
          %v931 = vld [vmem:[%s857 + $0xb0] sm:$0xff]
          %v932 = vld [vmem:[%s857 + $0xb8] sm:$0xff]
          %v933 = vld [vmem:[%s857 + $0xc0] sm:$0xff]
          %v934 = vld [vmem:[%s857 + $0xc8] sm:$0xff]
          %v935 = vld [vmem:[%s857 + $0xd0] sm:$0xff]
          %v936 = vld [vmem:[%s857 + $0xd8] sm:$0xff]
          %v937 = vld [vmem:[%s857 + $0xe0] sm:$0xff]
          %v938 = vld [vmem:[%s857 + $0xe8] sm:$0xff]
          %v939 = vld [vmem:[%s857 + $0xf0] sm:$0xff]
          %v940 = vld [vmem:[%s857 + $0xf8] sm:$0xff]
          %v941 = vld [vmem:[%s857 + $0x100] sm:$0xff]
          %v942 = vld [vmem:[%s857 + $0x108] sm:$0xff]
          %v943 = vld [vmem:[%s857 + $0x110] sm:$0xff]
          %v944 = vld [vmem:[%s857 + $0x118] sm:$0xff]
          %v945 = vld [vmem:[%s857 + $0x120] sm:$0xff]
          %v946 = vld [vmem:[%s857 + $0x128] sm:$0xff]
          %v947 = vld [vmem:[%s857 + $0x130] sm:$0xff]
          %v948 = vld [vmem:[%s857 + $0x138] sm:$0xff]
          %v949 = vld [vmem:[%s857 + $0x140] sm:$0xff]
          %v950 = vld [vmem:[%s857 + $0x148] sm:$0xff]
          %v951 = vld [vmem:[%s857 + $0x150] sm:$0xff]
          %v952 = vld [vmem:[%s857 + $0x158] sm:$0xff]
          %v953 = vld [vmem:[%s857 + $0x160] sm:$0xff]
          %v954 = vld [vmem:[%s857 + $0x168] sm:$0xff]
          %v955 = vld [vmem:[%s857 + $0x170] sm:$0xff]
          %v956 = vld [vmem:[%s857 + $0x178] sm:$0xff]
          %v957 = vld [vmem:[%s857 + $0x180] sm:$0xff]
          %v958 = vld [vmem:[%s857 + $0x188] sm:$0xff]
          %v959 = vld [vmem:[%s857 + $0x190] sm:$0xff]
          %v960 = vld [vmem:[%s857 + $0x198] sm:$0xff]
          %v961 = vld [vmem:[%s857 + $0x1a0] sm:$0xff]
          %v962 = vld [vmem:[%s857 + $0x1a8] sm:$0xff]
          %v963 = vld [vmem:[%s857 + $0x1b0] sm:$0xff]
          %v964 = vld [vmem:[%s857 + $0x1b8] sm:$0xff]
          %v965 = vld [vmem:[%s857 + $0x1c0] sm:$0xff]
          %v966 = vld [vmem:[%s857 + $0x1c8] sm:$0xff]
          %v967 = vld [vmem:[%s857 + $0x1d0] sm:$0xff]
          %v968 = vld [vmem:[%s857 + $0x1d8] sm:$0xff]
          %v969 = vld [vmem:[%s857 + $0x1e0] sm:$0xff]
          %v970 = vld [vmem:[%s857 + $0x1e8] sm:$0xff]
          %v971 = vld [vmem:[%s857 + $0x1f0] sm:$0xff]
          %v972 = vld [vmem:[%s857 + $0x1f8] sm:$0xff]
          %v973 = vld [vmem:[%s864] sm:$0xff]
          %v974 = vld [vmem:[%s864 + $0x8] sm:$0xff]
          %v975 = vld [vmem:[%s864 + $0x10] sm:$0xff]
          %v976 = vld [vmem:[%s864 + $0x18] sm:$0xff]
          %v977 = vld [vmem:[%s864 + $0x20] sm:$0xff]
          %v978 = vld [vmem:[%s864 + $0x28] sm:$0xff]
          %v979 = vld [vmem:[%s864 + $0x30] sm:$0xff]
          %v980 = vld [vmem:[%s864 + $0x38] sm:$0xff]
          %v981 = vld [vmem:[%s864 + $0x40] sm:$0xff]
          %v982 = vld [vmem:[%s864 + $0x48] sm:$0xff]
          %v983 = vld [vmem:[%s864 + $0x50] sm:$0xff]
          %v984 = vld [vmem:[%s864 + $0x58] sm:$0xff]
          %v985 = vld [vmem:[%s864 + $0x60] sm:$0xff]
          %v986 = vld [vmem:[%s864 + $0x68] sm:$0xff]
          %v987 = vld [vmem:[%s864 + $0x70] sm:$0xff]
          %v988 = vld [vmem:[%s864 + $0x78] sm:$0xff]
          %v989 = vld [vmem:[%s864 + $0x80] sm:$0xff]
          %v990 = vld [vmem:[%s864 + $0x88] sm:$0xff]
          %v991 = vld [vmem:[%s864 + $0x90] sm:$0xff]
          %v992 = vld [vmem:[%s864 + $0x98] sm:$0xff]
          %v993 = vld [vmem:[%s864 + $0xa0] sm:$0xff]
          %v994 = vld [vmem:[%s864 + $0xa8] sm:$0xff]
          %v995 = vld [vmem:[%s864 + $0xb0] sm:$0xff]
          %v996 = vld [vmem:[%s864 + $0xb8] sm:$0xff]
          %v997 = vld [vmem:[%s864 + $0xc0] sm:$0xff]
          %v998 = vld [vmem:[%s864 + $0xc8] sm:$0xff]
          %v999 = vld [vmem:[%s864 + $0xd0] sm:$0xff]
          %v1000 = vld [vmem:[%s864 + $0xd8] sm:$0xff]
          %v1001 = vld [vmem:[%s864 + $0xe0] sm:$0xff]
          %v1002 = vld [vmem:[%s864 + $0xe8] sm:$0xff]
          %v1003 = vld [vmem:[%s864 + $0xf0] sm:$0xff]
          %v1004 = vld [vmem:[%s864 + $0xf8] sm:$0xff]
          %v1005 = vld [vmem:[%s864 + $0x100] sm:$0xff]
          %v1006 = vld [vmem:[%s864 + $0x108] sm:$0xff]
          %v1007 = vld [vmem:[%s864 + $0x110] sm:$0xff]
          %v1008 = vld [vmem:[%s864 + $0x118] sm:$0xff]
          %v1009 = vld [vmem:[%s864 + $0x120] sm:$0xff]
          %v1010 = vld [vmem:[%s864 + $0x128] sm:$0xff]
          %v1011 = vld [vmem:[%s864 + $0x130] sm:$0xff]
          %v1012 = vld [vmem:[%s864 + $0x138] sm:$0xff]
          %v1013 = vld [vmem:[%s864 + $0x140] sm:$0xff]
          %v1014 = vld [vmem:[%s864 + $0x148] sm:$0xff]
          %v1015 = vld [vmem:[%s864 + $0x150] sm:$0xff]
          %v1016 = vld [vmem:[%s864 + $0x158] sm:$0xff]
          %v1017 = vld [vmem:[%s864 + $0x160] sm:$0xff]
          %v1018 = vld [vmem:[%s864 + $0x168] sm:$0xff]
          %v1019 = vld [vmem:[%s864 + $0x170] sm:$0xff]
          %v1020 = vld [vmem:[%s864 + $0x178] sm:$0xff]
          %v1021 = vld [vmem:[%s864 + $0x180] sm:$0xff]
          %v1022 = vld [vmem:[%s864 + $0x188] sm:$0xff]
          %v1023 = vld [vmem:[%s864 + $0x190] sm:$0xff]
          %v1024 = vld [vmem:[%s864 + $0x198] sm:$0xff]
          %v1025 = vld [vmem:[%s864 + $0x1a0] sm:$0xff]
          %v1026 = vld [vmem:[%s864 + $0x1a8] sm:$0xff]
          %v1027 = vld [vmem:[%s864 + $0x1b0] sm:$0xff]
          %v1028 = vld [vmem:[%s864 + $0x1b8] sm:$0xff]
          %v1029 = vld [vmem:[%s864 + $0x1c0] sm:$0xff]
          %v1030 = vld [vmem:[%s864 + $0x1c8] sm:$0xff]
          %v1031 = vld [vmem:[%s864 + $0x1d0] sm:$0xff]
          %v1032 = vld [vmem:[%s864 + $0x1d8] sm:$0xff]
          %v1033 = vld [vmem:[%s864 + $0x1e0] sm:$0xff]
          %v1034 = vld [vmem:[%s864 + $0x1e8] sm:$0xff]
          %v1035 = vld [vmem:[%s864 + $0x1f0] sm:$0xff]
          %v1036 = vld [vmem:[%s864 + $0x1f8] sm:$0xff]
          %v1037 = vrcp.pop %v973
          %v1038 = vmul.f32 %v909, %v1037
          %v1039 = vrcp.pop %v974
          %v1040 = vmul.f32 %v910, %v1039
          %v1041 = vrcp.pop %v975
          %v1042 = vmul.f32 %v911, %v1041
          %v1043 = vrcp.pop %v976
          %v1044 = vmul.f32 %v912, %v1043
          %v1045 = vrcp.pop %v977
          %v1046 = vmul.f32 %v913, %v1045
          %v1047 = vrcp.pop %v978
          %v1048 = vmul.f32 %v914, %v1047
          %v1049 = vrcp.pop %v979
          %v1050 = vmul.f32 %v915, %v1049
          %v1051 = vrcp.pop %v980
          %v1052 = vmul.f32 %v916, %v1051
          %v1053 = vrcp.pop %v981
          %v1054 = vmul.f32 %v917, %v1053
          %v1055 = vrcp.pop %v982
          %v1056 = vmul.f32 %v918, %v1055
          %v1057 = vrcp.pop %v983
          %v1058 = vmul.f32 %v919, %v1057
          %v1059 = vrcp.pop %v984
          %v1060 = vmul.f32 %v920, %v1059
          %v1061 = vrcp.pop %v985
          %v1062 = vmul.f32 %v921, %v1061
          %v1063 = vrcp.pop %v986
          %v1064 = vmul.f32 %v922, %v1063
          %v1065 = vrcp.pop %v987
          %v1066 = vmul.f32 %v923, %v1065
          %v1067 = vrcp.pop %v988
          %v1068 = vmul.f32 %v924, %v1067
          %v1069 = vrcp.pop %v989
          %v1070 = vmul.f32 %v925, %v1069
          %v1071 = vrcp.pop %v990
          %v1072 = vmul.f32 %v926, %v1071
          %v1073 = vrcp.pop %v991
          %v1074 = vmul.f32 %v927, %v1073
          %v1075 = vrcp.pop %v992
          %v1076 = vmul.f32 %v928, %v1075
          %v1077 = vrcp.pop %v993
          %v1078 = vmul.f32 %v929, %v1077
          %v1079 = vrcp.pop %v994
          %v1080 = vmul.f32 %v930, %v1079
          %v1081 = vrcp.pop %v995
          %v1082 = vmul.f32 %v931, %v1081
          %v1083 = vrcp.pop %v996
          %v1084 = vmul.f32 %v932, %v1083
          %v1085 = vrcp.pop %v997
          %v1086 = vmul.f32 %v933, %v1085
          %v1087 = vrcp.pop %v998
          %v1088 = vmul.f32 %v934, %v1087
          %v1089 = vrcp.pop %v999
          %v1090 = vmul.f32 %v935, %v1089
          %v1091 = vrcp.pop %v1000
          %v1092 = vmul.f32 %v936, %v1091
          %v1093 = vrcp.pop %v1001
          %v1094 = vmul.f32 %v937, %v1093
          %v1095 = vrcp.pop %v1002
          %v1096 = vmul.f32 %v938, %v1095
          %v1097 = vrcp.pop %v1003
          %v1098 = vmul.f32 %v939, %v1097
          %v1099 = vrcp.pop %v1004
          %v1100 = vmul.f32 %v940, %v1099
          %v1101 = vrcp.pop %v1005
          %v1102 = vmul.f32 %v941, %v1101
          %v1103 = vrcp.pop %v1006
          %v1104 = vmul.f32 %v942, %v1103
          %v1105 = vrcp.pop %v1007
          %v1106 = vmul.f32 %v943, %v1105
          %v1107 = vrcp.pop %v1008
          %v1108 = vmul.f32 %v944, %v1107
          %v1109 = vrcp.pop %v1009
          %v1110 = vmul.f32 %v945, %v1109
          %v1111 = vrcp.pop %v1010
          %v1112 = vmul.f32 %v946, %v1111
          %v1113 = vrcp.pop %v1011
          %v1114 = vmul.f32 %v947, %v1113
          %v1115 = vrcp.pop %v1012
          %v1116 = vmul.f32 %v948, %v1115
          %v1117 = vrcp.pop %v1013
          %v1118 = vmul.f32 %v949, %v1117
          %v1119 = vrcp.pop %v1014
          %v1120 = vmul.f32 %v950, %v1119
          %v1121 = vrcp.pop %v1015
          %v1122 = vmul.f32 %v951, %v1121
          %v1123 = vrcp.pop %v1016
          %v1124 = vmul.f32 %v952, %v1123
          %v1125 = vrcp.pop %v1017
          %v1126 = vmul.f32 %v953, %v1125
          %v1127 = vrcp.pop %v1018
          %v1128 = vmul.f32 %v954, %v1127
          %v1129 = vrcp.pop %v1019
          %v1130 = vmul.f32 %v955, %v1129
          %v1131 = vrcp.pop %v1020
          %v1132 = vmul.f32 %v956, %v1131
          %v1133 = vrcp.pop %v1021
          %v1134 = vmul.f32 %v957, %v1133
          %v1135 = vrcp.pop %v1022
          %v1136 = vmul.f32 %v958, %v1135
          %v1137 = vrcp.pop %v1023
          %v1138 = vmul.f32 %v959, %v1137
          %v1139 = vrcp.pop %v1024
          %v1140 = vmul.f32 %v960, %v1139
          %v1141 = vrcp.pop %v1025
          %v1142 = vmul.f32 %v961, %v1141
          %v1143 = vrcp.pop %v1026
          %v1144 = vmul.f32 %v962, %v1143
          %v1145 = vrcp.pop %v1027
          %v1146 = vmul.f32 %v963, %v1145
          %v1147 = vrcp.pop %v1028
          %v1148 = vmul.f32 %v964, %v1147
          %v1149 = vrcp.pop %v1029
          %v1150 = vmul.f32 %v965, %v1149
          %v1151 = vrcp.pop %v1030
          %v1152 = vmul.f32 %v966, %v1151
          %v1153 = vrcp.pop %v1031
          %v1154 = vmul.f32 %v967, %v1153
          %v1155 = vrcp.pop %v1032
          %v1156 = vmul.f32 %v968, %v1155
          %v1157 = vrcp.pop %v1033
          %v1158 = vmul.f32 %v969, %v1157
          %v1159 = vrcp.pop %v1034
          %v1160 = vmul.f32 %v970, %v1159
          %v1161 = vrcp.pop %v1035
          %v1162 = vmul.f32 %v971, %v1161
          %v1163 = vrcp.pop %v1036
          %v1164 = vmul.f32 %v972, %v1163
          %v1165 = vround.ne.pseudo %v1038
          %v1166 = vround.ne.pseudo %v1040
          %v1167 = vround.ne.pseudo %v1042
          %v1168 = vround.ne.pseudo %v1044
          %v1169 = vround.ne.pseudo %v1046
          %v1170 = vround.ne.pseudo %v1048
          %v1171 = vround.ne.pseudo %v1050
          %v1172 = vround.ne.pseudo %v1052
          %v1173 = vround.ne.pseudo %v1054
          %v1174 = vround.ne.pseudo %v1056
          %v1175 = vround.ne.pseudo %v1058
          %v1176 = vround.ne.pseudo %v1060
          %v1177 = vround.ne.pseudo %v1062
          %v1178 = vround.ne.pseudo %v1064
          %v1179 = vround.ne.pseudo %v1066
          %v1180 = vround.ne.pseudo %v1068
          %v1181 = vround.ne.pseudo %v1070
          %v1182 = vround.ne.pseudo %v1072
          %v1183 = vround.ne.pseudo %v1074
          %v1184 = vround.ne.pseudo %v1076
          %v1185 = vround.ne.pseudo %v1078
          %v1186 = vround.ne.pseudo %v1080
          %v1187 = vround.ne.pseudo %v1082
          %v1188 = vround.ne.pseudo %v1084
          %v1189 = vround.ne.pseudo %v1086
          %v1190 = vround.ne.pseudo %v1088
          %v1191 = vround.ne.pseudo %v1090
          %v1192 = vround.ne.pseudo %v1092
          %v1193 = vround.ne.pseudo %v1094
          %v1194 = vround.ne.pseudo %v1096
          %v1195 = vround.ne.pseudo %v1098
          %v1196 = vround.ne.pseudo %v1100
          %v1197 = vround.ne.pseudo %v1102
          %v1198 = vround.ne.pseudo %v1104
          %v1199 = vround.ne.pseudo %v1106
          %v1200 = vround.ne.pseudo %v1108
          %v1201 = vround.ne.pseudo %v1110
          %v1202 = vround.ne.pseudo %v1112
          %v1203 = vround.ne.pseudo %v1114
          %v1204 = vround.ne.pseudo %v1116
          %v1205 = vround.ne.pseudo %v1118
          %v1206 = vround.ne.pseudo %v1120
          %v1207 = vround.ne.pseudo %v1122
          %v1208 = vround.ne.pseudo %v1124
          %v1209 = vround.ne.pseudo %v1126
          %v1210 = vround.ne.pseudo %v1128
          %v1211 = vround.ne.pseudo %v1130
          %v1212 = vround.ne.pseudo %v1132
          %v1213 = vround.ne.pseudo %v1134
          %v1214 = vround.ne.pseudo %v1136
          %v1215 = vround.ne.pseudo %v1138
          %v1216 = vround.ne.pseudo %v1140
          %v1217 = vround.ne.pseudo %v1142
          %v1218 = vround.ne.pseudo %v1144
          %v1219 = vround.ne.pseudo %v1146
          %v1220 = vround.ne.pseudo %v1148
          %v1221 = vround.ne.pseudo %v1150
          %v1222 = vround.ne.pseudo %v1152
          %v1223 = vround.ne.pseudo %v1154
          %v1224 = vround.ne.pseudo %v1156
          %v1225 = vround.ne.pseudo %v1158
          %v1226 = vround.ne.pseudo %v1160
          %v1227 = vround.ne.pseudo %v1162
          %v1228 = vround.ne.pseudo %v1164
          %v1229 = vmax.f32 %v1165, -128.0
          %v1230 = vmax.f32 %v1166, -128.0
          %v1231 = vmax.f32 %v1167, -128.0
          %v1232 = vmax.f32 %v1168, -128.0
          %v1233 = vmax.f32 %v1169, -128.0
          %v1234 = vmax.f32 %v1170, -128.0
          %v1235 = vmax.f32 %v1171, -128.0
          %v1236 = vmax.f32 %v1172, -128.0
          %v1237 = vmax.f32 %v1173, -128.0
          %v1238 = vmax.f32 %v1174, -128.0
          %v1239 = vmax.f32 %v1175, -128.0
          %v1240 = vmax.f32 %v1176, -128.0
          %v1241 = vmax.f32 %v1177, -128.0
          %v1242 = vmax.f32 %v1178, -128.0
          %v1243 = vmax.f32 %v1179, -128.0
          %v1244 = vmax.f32 %v1180, -128.0
          %v1245 = vmax.f32 %v1181, -128.0
          %v1246 = vmax.f32 %v1182, -128.0
          %v1247 = vmax.f32 %v1183, -128.0
          %v1248 = vmax.f32 %v1184, -128.0
          %v1249 = vmax.f32 %v1185, -128.0
          %v1250 = vmax.f32 %v1186, -128.0
          %v1251 = vmax.f32 %v1187, -128.0
          %v1252 = vmax.f32 %v1188, -128.0
          %v1253 = vmax.f32 %v1189, -128.0
          %v1254 = vmax.f32 %v1190, -128.0
          %v1255 = vmax.f32 %v1191, -128.0
          %v1256 = vmax.f32 %v1192, -128.0
          %v1257 = vmax.f32 %v1193, -128.0
          %v1258 = vmax.f32 %v1194, -128.0
          %v1259 = vmax.f32 %v1195, -128.0
          %v1260 = vmax.f32 %v1196, -128.0
          %v1261 = vmax.f32 %v1197, -128.0
          %v1262 = vmax.f32 %v1198, -128.0
          %v1263 = vmax.f32 %v1199, -128.0
          %v1264 = vmax.f32 %v1200, -128.0
          %v1265 = vmax.f32 %v1201, -128.0
          %v1266 = vmax.f32 %v1202, -128.0
          %v1267 = vmax.f32 %v1203, -128.0
          %v1268 = vmax.f32 %v1204, -128.0
          %v1269 = vmax.f32 %v1205, -128.0
          %v1270 = vmax.f32 %v1206, -128.0
          %v1271 = vmax.f32 %v1207, -128.0
          %v1272 = vmax.f32 %v1208, -128.0
          %v1273 = vmax.f32 %v1209, -128.0
          %v1274 = vmax.f32 %v1210, -128.0
          %v1275 = vmax.f32 %v1211, -128.0
          %v1276 = vmax.f32 %v1212, -128.0
          %v1277 = vmax.f32 %v1213, -128.0
          %v1278 = vmax.f32 %v1214, -128.0
          %v1279 = vmax.f32 %v1215, -128.0
          %v1280 = vmax.f32 %v1216, -128.0
          %v1281 = vmax.f32 %v1217, -128.0
          %v1282 = vmax.f32 %v1218, -128.0
          %v1283 = vmax.f32 %v1219, -128.0
          %v1284 = vmax.f32 %v1220, -128.0
          %v1285 = vmax.f32 %v1221, -128.0
          %v1286 = vmax.f32 %v1222, -128.0
          %v1287 = vmax.f32 %v1223, -128.0
          %v1288 = vmax.f32 %v1224, -128.0
          %v1289 = vmax.f32 %v1225, -128.0
          %v1290 = vmax.f32 %v1226, -128.0
          %v1291 = vmax.f32 %v1227, -128.0
          %v1292 = vmax.f32 %v1228, -128.0
          %v1293 = vmin.f32 %v1229, 127.0
          %v1294 = vmin.f32 %v1230, 127.0
          %v1295 = vmin.f32 %v1231, 127.0
          %v1296 = vmin.f32 %v1232, 127.0
          %v1297 = vmin.f32 %v1233, 127.0
          %v1298 = vmin.f32 %v1234, 127.0
          %v1299 = vmin.f32 %v1235, 127.0
          %v1300 = vmin.f32 %v1236, 127.0
          %v1301 = vmin.f32 %v1237, 127.0
          %v1302 = vmin.f32 %v1238, 127.0
          %v1303 = vmin.f32 %v1239, 127.0
          %v1304 = vmin.f32 %v1240, 127.0
          %v1305 = vmin.f32 %v1241, 127.0
          %v1306 = vmin.f32 %v1242, 127.0
          %v1307 = vmin.f32 %v1243, 127.0
          %v1308 = vmin.f32 %v1244, 127.0
          %v1309 = vmin.f32 %v1245, 127.0
          %v1310 = vmin.f32 %v1246, 127.0
          %v1311 = vmin.f32 %v1247, 127.0
          %v1312 = vmin.f32 %v1248, 127.0
          %v1313 = vmin.f32 %v1249, 127.0
          %v1314 = vmin.f32 %v1250, 127.0
          %v1315 = vmin.f32 %v1251, 127.0
          %v1316 = vmin.f32 %v1252, 127.0
          %v1317 = vmin.f32 %v1253, 127.0
          %v1318 = vmin.f32 %v1254, 127.0
          %v1319 = vmin.f32 %v1255, 127.0
          %v1320 = vmin.f32 %v1256, 127.0
          %v1321 = vmin.f32 %v1257, 127.0
          %v1322 = vmin.f32 %v1258, 127.0
          %v1323 = vmin.f32 %v1259, 127.0
          %v1324 = vmin.f32 %v1260, 127.0
          %v1325 = vmin.f32 %v1261, 127.0
          %v1326 = vmin.f32 %v1262, 127.0
          %v1327 = vmin.f32 %v1263, 127.0
          %v1328 = vmin.f32 %v1264, 127.0
          %v1329 = vmin.f32 %v1265, 127.0
          %v1330 = vmin.f32 %v1266, 127.0
          %v1331 = vmin.f32 %v1267, 127.0
          %v1332 = vmin.f32 %v1268, 127.0
          %v1333 = vmin.f32 %v1269, 127.0
          %v1334 = vmin.f32 %v1270, 127.0
          %v1335 = vmin.f32 %v1271, 127.0
          %v1336 = vmin.f32 %v1272, 127.0
          %v1337 = vmin.f32 %v1273, 127.0
          %v1338 = vmin.f32 %v1274, 127.0
          %v1339 = vmin.f32 %v1275, 127.0
          %v1340 = vmin.f32 %v1276, 127.0
          %v1341 = vmin.f32 %v1277, 127.0
          %v1342 = vmin.f32 %v1278, 127.0
          %v1343 = vmin.f32 %v1279, 127.0
          %v1344 = vmin.f32 %v1280, 127.0
          %v1345 = vmin.f32 %v1281, 127.0
          %v1346 = vmin.f32 %v1282, 127.0
          %v1347 = vmin.f32 %v1283, 127.0
          %v1348 = vmin.f32 %v1284, 127.0
          %v1349 = vmin.f32 %v1285, 127.0
          %v1350 = vmin.f32 %v1286, 127.0
          %v1351 = vmin.f32 %v1287, 127.0
          %v1352 = vmin.f32 %v1288, 127.0
          %v1353 = vmin.f32 %v1289, 127.0
          %v1354 = vmin.f32 %v1290, 127.0
          %v1355 = vmin.f32 %v1291, 127.0
          %v1356 = vmin.f32 %v1292, 127.0
          %v1357 = vmul.f32 %v1293, %v973
          %v1358 = vmul.f32 %v1294, %v974
          %v1359 = vmul.f32 %v1295, %v975
          %v1360 = vmul.f32 %v1296, %v976
          %v1361 = vmul.f32 %v1297, %v977
          %v1362 = vmul.f32 %v1298, %v978
          %v1363 = vmul.f32 %v1299, %v979
          %v1364 = vmul.f32 %v1300, %v980
          %v1365 = vmul.f32 %v1301, %v981
          %v1366 = vmul.f32 %v1302, %v982
          %v1367 = vmul.f32 %v1303, %v983
          %v1368 = vmul.f32 %v1304, %v984
          %v1369 = vmul.f32 %v1305, %v985
          %v1370 = vmul.f32 %v1306, %v986
          %v1371 = vmul.f32 %v1307, %v987
          %v1372 = vmul.f32 %v1308, %v988
          %v1373 = vmul.f32 %v1309, %v989
          %v1374 = vmul.f32 %v1310, %v990
          %v1375 = vmul.f32 %v1311, %v991
          %v1376 = vmul.f32 %v1312, %v992
          %v1377 = vmul.f32 %v1313, %v993
          %v1378 = vmul.f32 %v1314, %v994
          %v1379 = vmul.f32 %v1315, %v995
          %v1380 = vmul.f32 %v1316, %v996
          %v1381 = vmul.f32 %v1317, %v997
          %v1382 = vmul.f32 %v1318, %v998
          %v1383 = vmul.f32 %v1319, %v999
          %v1384 = vmul.f32 %v1320, %v1000
          %v1385 = vmul.f32 %v1321, %v1001
          %v1386 = vmul.f32 %v1322, %v1002
          %v1387 = vmul.f32 %v1323, %v1003
          %v1388 = vmul.f32 %v1324, %v1004
          %v1389 = vmul.f32 %v1325, %v1005
          %v1390 = vmul.f32 %v1326, %v1006
          %v1391 = vmul.f32 %v1327, %v1007
          %v1392 = vmul.f32 %v1328, %v1008
          %v1393 = vmul.f32 %v1329, %v1009
          %v1394 = vmul.f32 %v1330, %v1010
          %v1395 = vmul.f32 %v1331, %v1011
          %v1396 = vmul.f32 %v1332, %v1012
          %v1397 = vmul.f32 %v1333, %v1013
          %v1398 = vmul.f32 %v1334, %v1014
          %v1399 = vmul.f32 %v1335, %v1015
          %v1400 = vmul.f32 %v1336, %v1016
          %v1401 = vmul.f32 %v1337, %v1017
          %v1402 = vmul.f32 %v1338, %v1018
          %v1403 = vmul.f32 %v1339, %v1019
          %v1404 = vmul.f32 %v1340, %v1020
          %v1405 = vmul.f32 %v1341, %v1021
          %v1406 = vmul.f32 %v1342, %v1022
          %v1407 = vmul.f32 %v1343, %v1023
          %v1408 = vmul.f32 %v1344, %v1024
          %v1409 = vmul.f32 %v1345, %v1025
          %v1410 = vmul.f32 %v1346, %v1026
          %v1411 = vmul.f32 %v1347, %v1027
          %v1412 = vmul.f32 %v1348, %v1028
          %v1413 = vmul.f32 %v1349, %v1029
          %v1414 = vmul.f32 %v1350, %v1030
          %v1415 = vmul.f32 %v1351, %v1031
          %v1416 = vmul.f32 %v1352, %v1032
          %v1417 = vmul.f32 %v1353, %v1033
          %v1418 = vmul.f32 %v1354, %v1034
          %v1419 = vmul.f32 %v1355, %v1035
          %v1420 = vmul.f32 %v1356, %v1036
          %v1421 = vpack.c.bf16 %v1358, %v1357
          %v1422 = vpack.c.bf16 %v1360, %v1359
          %v1423 = vpack.c.bf16 %v1362, %v1361
          %v1424 = vpack.c.bf16 %v1364, %v1363
          %v1425 = vpack.c.bf16 %v1366, %v1365
          %v1426 = vpack.c.bf16 %v1368, %v1367
          %v1427 = vpack.c.bf16 %v1370, %v1369
          %v1428 = vpack.c.bf16 %v1372, %v1371
          %v1429 = vpack.c.bf16 %v1374, %v1373
          %v1430 = vpack.c.bf16 %v1376, %v1375
          %v1431 = vpack.c.bf16 %v1378, %v1377
          %v1432 = vpack.c.bf16 %v1380, %v1379
          %v1433 = vpack.c.bf16 %v1382, %v1381
          %v1434 = vpack.c.bf16 %v1384, %v1383
          %v1435 = vpack.c.bf16 %v1386, %v1385
          %v1436 = vpack.c.bf16 %v1388, %v1387
          %v1437 = vpack.c.bf16 %v1390, %v1389
          %v1438 = vpack.c.bf16 %v1392, %v1391
          %v1439 = vpack.c.bf16 %v1394, %v1393
          %v1440 = vpack.c.bf16 %v1396, %v1395
          %v1441 = vpack.c.bf16 %v1398, %v1397
          %v1442 = vpack.c.bf16 %v1400, %v1399
          %v1443 = vpack.c.bf16 %v1402, %v1401
          %v1444 = vpack.c.bf16 %v1404, %v1403
          %v1445 = vpack.c.bf16 %v1406, %v1405
          %v1446 = vpack.c.bf16 %v1408, %v1407
          %v1447 = vpack.c.bf16 %v1410, %v1409
          %v1448 = vpack.c.bf16 %v1412, %v1411
          %v1449 = vpack.c.bf16 %v1414, %v1413
          %v1450 = vpack.c.bf16 %v1416, %v1415
          %v1451 = vpack.c.bf16 %v1418, %v1417
          %v1452 = vpack.c.bf16 %v1420, %v1419
          %s1453 = smul.u32 %s24, 32
          %s1454 = smul.addr %s1453, 8
          %s1455 = scalar_lea.vmem [#allocation3], %s1454
          %vm1456 = vcmask 261120
          %1457 = vst.msk [vmem:[%s1455] sm:$0xff] %vm1456, %v1421
          %1458 = vst.msk [vmem:[%s1455 + $0x8] sm:$0xff] %vm1456, %v1422
          %1459 = vst.msk [vmem:[%s1455 + $0x10] sm:$0xff] %vm1456, %v1423
          %1460 = vst.msk [vmem:[%s1455 + $0x18] sm:$0xff] %vm1456, %v1424
          %1461 = vst.msk [vmem:[%s1455 + $0x20] sm:$0xff] %vm1456, %v1425
          %1462 = vst.msk [vmem:[%s1455 + $0x28] sm:$0xff] %vm1456, %v1426
          %1463 = vst.msk [vmem:[%s1455 + $0x30] sm:$0xff] %vm1456, %v1427
          %1464 = vst.msk [vmem:[%s1455 + $0x38] sm:$0xff] %vm1456, %v1428
          %1465 = vst.msk [vmem:[%s1455 + $0x40] sm:$0xff] %vm1456, %v1429
          %1466 = vst.msk [vmem:[%s1455 + $0x48] sm:$0xff] %vm1456, %v1430
          %1467 = vst.msk [vmem:[%s1455 + $0x50] sm:$0xff] %vm1456, %v1431
          %1468 = vst.msk [vmem:[%s1455 + $0x58] sm:$0xff] %vm1456, %v1432
          %1469 = vst.msk [vmem:[%s1455 + $0x60] sm:$0xff] %vm1456, %v1433
          %1470 = vst.msk [vmem:[%s1455 + $0x68] sm:$0xff] %vm1456, %v1434
          %1471 = vst.msk [vmem:[%s1455 + $0x70] sm:$0xff] %vm1456, %v1435
          %1472 = vst.msk [vmem:[%s1455 + $0x78] sm:$0xff] %vm1456, %v1436
          %1473 = vst.msk [vmem:[%s1455 + $0x80] sm:$0xff] %vm1456, %v1437
          %1474 = vst.msk [vmem:[%s1455 + $0x88] sm:$0xff] %vm1456, %v1438
          %1475 = vst.msk [vmem:[%s1455 + $0x90] sm:$0xff] %vm1456, %v1439
          %1476 = vst.msk [vmem:[%s1455 + $0x98] sm:$0xff] %vm1456, %v1440
          %1477 = vst.msk [vmem:[%s1455 + $0xa0] sm:$0xff] %vm1456, %v1441
          %1478 = vst.msk [vmem:[%s1455 + $0xa8] sm:$0xff] %vm1456, %v1442
          %1479 = vst.msk [vmem:[%s1455 + $0xb0] sm:$0xff] %vm1456, %v1443
          %1480 = vst.msk [vmem:[%s1455 + $0xb8] sm:$0xff] %vm1456, %v1444
          %1481 = vst.msk [vmem:[%s1455 + $0xc0] sm:$0xff] %vm1456, %v1445
          %1482 = vst.msk [vmem:[%s1455 + $0xc8] sm:$0xff] %vm1456, %v1446
          %1483 = vst.msk [vmem:[%s1455 + $0xd0] sm:$0xff] %vm1456, %v1447
          %1484 = vst.msk [vmem:[%s1455 + $0xd8] sm:$0xff] %vm1456, %v1448
          %1485 = vst.msk [vmem:[%s1455 + $0xe0] sm:$0xff] %vm1456, %v1449
          %1486 = vst.msk [vmem:[%s1455 + $0xe8] sm:$0xff] %vm1456, %v1450
          %1487 = vst.msk [vmem:[%s1455 + $0xf0] sm:$0xff] %vm1456, %v1451
          %1488 = vst.msk [vmem:[%s1455 + $0xf8] sm:$0xff] %vm1456, %v1452
        $region150: #{tpu_custom_call.1} parent=133 // pred_fallthru
          _
        %p1489 = scmp.eq.s32.totalorder %s24, 0
        // Predicated region
        $region151: #{tpu_custom_call.1} parent=133 // pred_check
          %p1490 = pneg %p1489
        $region152: #{tpu_custom_call.1} parent=133 // pred_check_branch
          %1492 = sbr.rel (%p1490) target = $region154
        $region153: #{tpu_custom_call.1} parent=133 // pred_region
          %vm1493 = vcmask 261120
          %1494 = vst.msk [vmem:[#allocation2] sm:$0xff] %vm1493, 0.0
          %1495 = vst.msk [vmem:[#allocation2 + $0x8] sm:$0xff] %vm1493, 0.0
          %1496 = vst.msk [vmem:[#allocation2 + $0x10] sm:$0xff] %vm1493, 0.0
          %1497 = vst.msk [vmem:[#allocation2 + $0x18] sm:$0xff] %vm1493, 0.0
          %1498 = vst.msk [vmem:[#allocation2 + $0x20] sm:$0xff] %vm1493, 0.0
          %1499 = vst.msk [vmem:[#allocation2 + $0x28] sm:$0xff] %vm1493, 0.0
          %1500 = vst.msk [vmem:[#allocation2 + $0x30] sm:$0xff] %vm1493, 0.0
          %1501 = vst.msk [vmem:[#allocation2 + $0x38] sm:$0xff] %vm1493, 0.0
        $region154: #{tpu_custom_call.1} parent=133 // pred_fallthru
          _
        %v1502 = vld [vmem:[%s850] sm:$0xff]
        %v1503 = vld [vmem:[%s850 + $0x8] sm:$0xff]
        %v1504 = vld [vmem:[%s850 + $0x10] sm:$0xff]
        %v1505 = vld [vmem:[%s850 + $0x18] sm:$0xff]
        %v1506 = vld [vmem:[%s850 + $0x20] sm:$0xff]
        %v1507 = vld [vmem:[%s850 + $0x28] sm:$0xff]
        %v1508 = vld [vmem:[%s850 + $0x30] sm:$0xff]
        %v1509 = vld [vmem:[%s850 + $0x38] sm:$0xff]
        %v1510 = vmax.f32 %v1502, 0.01
        %v1511 = vmax.f32 %v1503, 0.01
        %v1512 = vmax.f32 %v1504, 0.01
        %v1513 = vmax.f32 %v1505, 0.01
        %v1514 = vmax.f32 %v1506, 0.01
        %v1515 = vmax.f32 %v1507, 0.01
        %v1516 = vmax.f32 %v1508, 0.01
        %v1517 = vmax.f32 %v1509, 0.01
        %v1518 = vmin.f32 %v1510, 1.0
        %v1519 = vmin.f32 %v1511, 1.0
        %v1520 = vmin.f32 %v1512, 1.0
        %v1521 = vmin.f32 %v1513, 1.0
        %v1522 = vmin.f32 %v1514, 1.0
        %v1523 = vmin.f32 %v1515, 1.0
        %v1524 = vmin.f32 %v1516, 1.0
        %v1525 = vmin.f32 %v1517, 1.0
        %v1526 = vmul.f32 %v1518, 127.0
        %v1527 = vmul.f32 %v1519, 127.0
        %v1528 = vmul.f32 %v1520, 127.0
        %v1529 = vmul.f32 %v1521, 127.0
        %v1530 = vmul.f32 %v1522, 127.0
        %v1531 = vmul.f32 %v1523, 127.0
        %v1532 = vmul.f32 %v1524, 127.0
        %v1533 = vmul.f32 %v1525, 127.0
        %v1534 = vround.ne.pseudo %v1526
        %v1535 = vround.ne.pseudo %v1527
        %v1536 = vround.ne.pseudo %v1528
        %v1537 = vround.ne.pseudo %v1529
        %v1538 = vround.ne.pseudo %v1530
        %v1539 = vround.ne.pseudo %v1531
        %v1540 = vround.ne.pseudo %v1532
        %v1541 = vround.ne.pseudo %v1533
        %v1542 = vmul.f32 %v1534, 0.007874016
        %v1543 = vmul.f32 %v1535, 0.007874016
        %v1544 = vmul.f32 %v1536, 0.007874016
        %v1545 = vmul.f32 %v1537, 0.007874016
        %v1546 = vmul.f32 %v1538, 0.007874016
        %v1547 = vmul.f32 %v1539, 0.007874016
        %v1548 = vmul.f32 %v1540, 0.007874016
        %v1549 = vmul.f32 %v1541, 0.007874016
        %v1550 = vmin.f32 %v1502, 0.01
        %v1551 = vmin.f32 %v1503, 0.01
        %v1552 = vmin.f32 %v1504, 0.01
        %v1553 = vmin.f32 %v1505, 0.01
        %v1554 = vmin.f32 %v1506, 0.01
        %v1555 = vmin.f32 %v1507, 0.01
        %v1556 = vmin.f32 %v1508, 0.01
        %v1557 = vmin.f32 %v1509, 0.01
        %v1558 = vmul.f32 %v1550, 12700.0
        %v1559 = vmul.f32 %v1551, 12700.0
        %v1560 = vmul.f32 %v1552, 12700.0
        %v1561 = vmul.f32 %v1553, 12700.0
        %v1562 = vmul.f32 %v1554, 12700.0
        %v1563 = vmul.f32 %v1555, 12700.0
        %v1564 = vmul.f32 %v1556, 12700.0
        %v1565 = vmul.f32 %v1557, 12700.0
        %v1566 = vround.ne.pseudo %v1558
        %v1567 = vround.ne.pseudo %v1559
        %v1568 = vround.ne.pseudo %v1560
        %v1569 = vround.ne.pseudo %v1561
        %v1570 = vround.ne.pseudo %v1562
        %v1571 = vround.ne.pseudo %v1563
        %v1572 = vround.ne.pseudo %v1564
        %v1573 = vround.ne.pseudo %v1565
        %v1574 = vmul.f32 %v1566, 7.874016e-05
        %v1575 = vmul.f32 %v1567, 7.874016e-05
        %v1576 = vmul.f32 %v1568, 7.874016e-05
        %v1577 = vmul.f32 %v1569, 7.874016e-05
        %v1578 = vmul.f32 %v1570, 7.874016e-05
        %v1579 = vmul.f32 %v1571, 7.874016e-05
        %v1580 = vmul.f32 %v1572, 7.874016e-05
        %v1581 = vmul.f32 %v1573, 7.874016e-05
        %v1582 = vadd.f32 %v1542, %v1574
        %v1583 = vadd.f32 %v1543, %v1575
        %v1584 = vadd.f32 %v1544, %v1576
        %v1585 = vadd.f32 %v1545, %v1577
        %v1586 = vadd.f32 %v1546, %v1578
        %v1587 = vadd.f32 %v1547, %v1579
        %v1588 = vadd.f32 %v1548, %v1580
        %v1589 = vadd.f32 %v1549, %v1581
        %v1590 = vpack.c.bf16 %v1583, %v1582
        %v1591 = vpack.c.bf16 %v1585, %v1584
        %v1592 = vpack.c.bf16 %v1587, %v1586
        %v1593 = vpack.c.bf16 %v1589, %v1588
        %v1594 = vld [vmem:[#allocation2] sm:$0xff]
        %v1595 = vld [vmem:[#allocation2 + $0x8] sm:$0xff]
        %v1596 = vld [vmem:[#allocation2 + $0x10] sm:$0xff]
        %v1597 = vld [vmem:[#allocation2 + $0x18] sm:$0xff]
        %v1598 = vld [vmem:[#allocation2 + $0x20] sm:$0xff]
        %v1599 = vld [vmem:[#allocation2 + $0x28] sm:$0xff]
        %v1600 = vld [vmem:[#allocation2 + $0x30] sm:$0xff]
        %v1601 = vld [vmem:[#allocation2 + $0x38] sm:$0xff]
        %s1602 = smul.u32 %s24, 32
        %s1603 = smul.addr %s1602, 8
        %s1604 = scalar_lea.vmem [#allocation3], %s1603
        %v1605 = vld [vmem:[%s1604] sm:$0xff]
        %v1606 = vld [vmem:[%s1604 + $0x8] sm:$0xff]
        %v1607 = vld [vmem:[%s1604 + $0x10] sm:$0xff]
        %v1608 = vld [vmem:[%s1604 + $0x18] sm:$0xff]
        %v1609 = vld [vmem:[%s1604 + $0x20] sm:$0xff]
        %v1610 = vld [vmem:[%s1604 + $0x28] sm:$0xff]
        %v1611 = vld [vmem:[%s1604 + $0x30] sm:$0xff]
        %v1612 = vld [vmem:[%s1604 + $0x38] sm:$0xff]
        %v1613 = vld [vmem:[%s1604 + $0x40] sm:$0xff]
        %v1614 = vld [vmem:[%s1604 + $0x48] sm:$0xff]
        %v1615 = vld [vmem:[%s1604 + $0x50] sm:$0xff]
        %v1616 = vld [vmem:[%s1604 + $0x58] sm:$0xff]
        %v1617 = vld [vmem:[%s1604 + $0x60] sm:$0xff]
        %v1618 = vld [vmem:[%s1604 + $0x68] sm:$0xff]
        %v1619 = vld [vmem:[%s1604 + $0x70] sm:$0xff]
        %v1620 = vld [vmem:[%s1604 + $0x78] sm:$0xff]
        %v1621 = vld [vmem:[%s1604 + $0x80] sm:$0xff]
        %v1622 = vld [vmem:[%s1604 + $0x88] sm:$0xff]
        %v1623 = vld [vmem:[%s1604 + $0x90] sm:$0xff]
        %v1624 = vld [vmem:[%s1604 + $0x98] sm:$0xff]
        %v1625 = vld [vmem:[%s1604 + $0xa0] sm:$0xff]
        %v1626 = vld [vmem:[%s1604 + $0xa8] sm:$0xff]
        %v1627 = vld [vmem:[%s1604 + $0xb0] sm:$0xff]
        %v1628 = vld [vmem:[%s1604 + $0xb8] sm:$0xff]
        %v1629 = vld [vmem:[%s1604 + $0xc0] sm:$0xff]
        %v1630 = vld [vmem:[%s1604 + $0xc8] sm:$0xff]
        %v1631 = vld [vmem:[%s1604 + $0xd0] sm:$0xff]
        %v1632 = vld [vmem:[%s1604 + $0xd8] sm:$0xff]
        %v1633 = vld [vmem:[%s1604 + $0xe0] sm:$0xff]
        %v1634 = vld [vmem:[%s1604 + $0xe8] sm:$0xff]
        %v1635 = vld [vmem:[%s1604 + $0xf0] sm:$0xff]
        %v1636 = vld [vmem:[%s1604 + $0xf8] sm:$0xff]
        %1637 = vmatprep.subr.bf16.mxu0 0
        %1638 = vmatpush1.bf16.msra.mxu0 %v1605
        %1639 = vmatprep.subr.bf16.mxu0 0
        %1640 = vmatpush1.bf16.msra.mxu0 %v1606
        %1641 = vmatprep.subr.bf16.mxu0 0
        %1642 = vmatpush1.bf16.msra.mxu0 %v1607
        %1643 = vmatprep.subr.bf16.mxu0 0
        %1644 = vmatpush1.bf16.msra.mxu0 %v1608
        %1645 = vmatprep.subr.bf16.mxu0 0
        %1646 = vmatpush1.bf16.msra.mxu0 %v1609
        %1647 = vmatprep.subr.bf16.mxu0 0
        %1648 = vmatpush1.bf16.msra.mxu0 %v1610
        %1649 = vmatprep.subr.bf16.mxu0 0
        %1650 = vmatpush1.bf16.msra.mxu0 %v1611
        %1651 = vmatprep.subr.bf16.mxu0 0
        %1652 = vmatpush1.bf16.msra.mxu0 %v1612
        %1653 = vmatprep.subr.bf16.mxu0 0
        %1654 = vmatpush1.bf16.msra.mxu0 0
        %1655 = vmatprep.subr.bf16.mxu0 0
        %1656 = vmatpush1.bf16.msra.mxu0 0
        %1657 = vmatprep.subr.bf16.mxu0 0
        %1658 = vmatpush1.bf16.msra.mxu0 0
        %1659 = vmatprep.subr.bf16.mxu0 0
        %1660 = vmatpush1.bf16.msra.mxu0 0
        %1661 = vmatprep.subr.bf16.mxu0 0
        %1662 = vmatpush1.bf16.msra.mxu0 0
        %1663 = vmatprep.subr.bf16.mxu0 0
        %1664 = vmatpush1.bf16.msra.mxu0 0
        %1665 = vmatprep.subr.bf16.mxu0 0
        %1666 = vmatpush1.bf16.msra.mxu0 0
        %1667 = vmatprep.subr.bf16.mxu0 0
        %1668 = vmatpush1.bf16.msra.mxu0 0
        %1669 = vmatprep.mubr.bf16.mxu0 0
        %1670 = vmatmul.mubr.bf16.gmra.mrb[0].mxu0 %v1590
        %v1671 = vpop.f32.mrb[0].mxu0
        %v1672 = vadd.f32 0.0, %v1671
        %v1673 = vpop.f32.mrb[0].mxu0
        %v1674 = vpop.f32.mrb[0].mxu0
        %v1675 = vadd.f32 0.0, %v1674
        %v1676 = vpop.f32.mrb[0].mxu0
        %1677 = vdwg.mxu0
        %1678 = vmatprep.subr.bf16.mxu0 0
        %1679 = vmatpush1.bf16.msra.mxu0 %v1613
        %1680 = vmatprep.subr.bf16.mxu0 0
        %1681 = vmatpush1.bf16.msra.mxu0 %v1614
        %1682 = vmatprep.subr.bf16.mxu0 0
        %1683 = vmatpush1.bf16.msra.mxu0 %v1615
        %1684 = vmatprep.subr.bf16.mxu0 0
        %1685 = vmatpush1.bf16.msra.mxu0 %v1616
        %1686 = vmatprep.subr.bf16.mxu0 0
        %1687 = vmatpush1.bf16.msra.mxu0 %v1617
        %1688 = vmatprep.subr.bf16.mxu0 0
        %1689 = vmatpush1.bf16.msra.mxu0 %v1618
        %1690 = vmatprep.subr.bf16.mxu0 0
        %1691 = vmatpush1.bf16.msra.mxu0 %v1619
        %1692 = vmatprep.subr.bf16.mxu0 0
        %1693 = vmatpush1.bf16.msra.mxu0 %v1620
        %1694 = vmatprep.subr.bf16.mxu0 0
        %1695 = vmatpush1.bf16.msra.mxu0 0
        %1696 = vmatprep.subr.bf16.mxu0 0
        %1697 = vmatpush1.bf16.msra.mxu0 0
        %1698 = vmatprep.subr.bf16.mxu0 0
        %1699 = vmatpush1.bf16.msra.mxu0 0
        %1700 = vmatprep.subr.bf16.mxu0 0
        %1701 = vmatpush1.bf16.msra.mxu0 0
        %1702 = vmatprep.subr.bf16.mxu0 0
        %1703 = vmatpush1.bf16.msra.mxu0 0
        %1704 = vmatprep.subr.bf16.mxu0 0
        %1705 = vmatpush1.bf16.msra.mxu0 0
        %1706 = vmatprep.subr.bf16.mxu0 0
        %1707 = vmatpush1.bf16.msra.mxu0 0
        %1708 = vmatprep.subr.bf16.mxu0 0
        %1709 = vmatpush1.bf16.msra.mxu0 0
        %1710 = vmatprep.mubr.bf16.mxu0 0
        %1711 = vmatmul.mubr.bf16.gmra.mrb[0].mxu0 %v1591
        %v1712 = vpop.f32.mrb[0].mxu0
        %v1713 = vadd.f32 0.0, %v1712
        %v1714 = vpop.f32.mrb[0].mxu0
        %v1715 = vpop.f32.mrb[0].mxu0
        %v1716 = vadd.f32 0.0, %v1715
        %v1717 = vpop.f32.mrb[0].mxu0
        %1718 = vdwg.mxu0
        %1719 = vmatprep.subr.bf16.mxu0 0
        %1720 = vmatpush1.bf16.msra.mxu0 %v1621
        %1721 = vmatprep.subr.bf16.mxu0 0
        %1722 = vmatpush1.bf16.msra.mxu0 %v1622
        %1723 = vmatprep.subr.bf16.mxu0 0
        %1724 = vmatpush1.bf16.msra.mxu0 %v1623
        %1725 = vmatprep.subr.bf16.mxu0 0
        %1726 = vmatpush1.bf16.msra.mxu0 %v1624
        %1727 = vmatprep.subr.bf16.mxu0 0
        %1728 = vmatpush1.bf16.msra.mxu0 %v1625
        %1729 = vmatprep.subr.bf16.mxu0 0
        %1730 = vmatpush1.bf16.msra.mxu0 %v1626
        %1731 = vmatprep.subr.bf16.mxu0 0
        %1732 = vmatpush1.bf16.msra.mxu0 %v1627
        %1733 = vmatprep.subr.bf16.mxu0 0
        %1734 = vmatpush1.bf16.msra.mxu0 %v1628
        %1735 = vmatprep.subr.bf16.mxu0 0
        %1736 = vmatpush1.bf16.msra.mxu0 0
        %1737 = vmatprep.subr.bf16.mxu0 0
        %1738 = vmatpush1.bf16.msra.mxu0 0
        %1739 = vmatprep.subr.bf16.mxu0 0
        %1740 = vmatpush1.bf16.msra.mxu0 0
        %1741 = vmatprep.subr.bf16.mxu0 0
        %1742 = vmatpush1.bf16.msra.mxu0 0
        %1743 = vmatprep.subr.bf16.mxu0 0
        %1744 = vmatpush1.bf16.msra.mxu0 0
        %1745 = vmatprep.subr.bf16.mxu0 0
        %1746 = vmatpush1.bf16.msra.mxu0 0
        %1747 = vmatprep.subr.bf16.mxu0 0
        %1748 = vmatpush1.bf16.msra.mxu0 0
        %1749 = vmatprep.subr.bf16.mxu0 0
        %1750 = vmatpush1.bf16.msra.mxu0 0
        %1751 = vmatprep.mubr.bf16.mxu0 0
        %1752 = vmatmul.mubr.bf16.gmra.mrb[0].mxu0 %v1592
        %v1753 = vpop.f32.mrb[0].mxu0
        %v1754 = vadd.f32 0.0, %v1753
        %v1755 = vpop.f32.mrb[0].mxu0
        %v1756 = vpop.f32.mrb[0].mxu0
        %v1757 = vadd.f32 0.0, %v1756
        %v1758 = vpop.f32.mrb[0].mxu0
        %1759 = vdwg.mxu0
        %1760 = vmatprep.subr.bf16.mxu0 0
        %1761 = vmatpush1.bf16.msra.mxu0 %v1629
        %1762 = vmatprep.subr.bf16.mxu0 0
        %1763 = vmatpush1.bf16.msra.mxu0 %v1630
        %1764 = vmatprep.subr.bf16.mxu0 0
        %1765 = vmatpush1.bf16.msra.mxu0 %v1631
        %1766 = vmatprep.subr.bf16.mxu0 0
        %1767 = vmatpush1.bf16.msra.mxu0 %v1632
        %1768 = vmatprep.subr.bf16.mxu0 0
        %1769 = vmatpush1.bf16.msra.mxu0 %v1633
        %1770 = vmatprep.subr.bf16.mxu0 0
        %1771 = vmatpush1.bf16.msra.mxu0 %v1634
        %1772 = vmatprep.subr.bf16.mxu0 0
        %1773 = vmatpush1.bf16.msra.mxu0 %v1635
        %1774 = vmatprep.subr.bf16.mxu0 0
        %1775 = vmatpush1.bf16.msra.mxu0 %v1636
        %1776 = vmatprep.subr.bf16.mxu0 0
        %1777 = vmatpush1.bf16.msra.mxu0 0
        %1778 = vmatprep.subr.bf16.mxu0 0
        %1779 = vmatpush1.bf16.msra.mxu0 0
        %1780 = vmatprep.subr.bf16.mxu0 0
        %1781 = vmatpush1.bf16.msra.mxu0 0
        %1782 = vmatprep.subr.bf16.mxu0 0
        %1783 = vmatpush1.bf16.msra.mxu0 0
        %1784 = vmatprep.subr.bf16.mxu0 0
        %1785 = vmatpush1.bf16.msra.mxu0 0
        %1786 = vmatprep.subr.bf16.mxu0 0
        %1787 = vmatpush1.bf16.msra.mxu0 0
        %1788 = vmatprep.subr.bf16.mxu0 0
        %1789 = vmatpush1.bf16.msra.mxu0 0
        %1790 = vmatprep.subr.bf16.mxu0 0
        %1791 = vmatpush1.bf16.msra.mxu0 0
        %1792 = vmatprep.mubr.bf16.mxu0 0
        %1793 = vmatmul.mubr.bf16.gmra.mrb[0].mxu0 %v1593
        %v1794 = vpop.f32.mrb[0].mxu0
        %v1795 = vadd.f32 0.0, %v1794
        %v1796 = vpop.f32.mrb[0].mxu0
        %v1797 = vpop.f32.mrb[0].mxu0
        %v1798 = vadd.f32 0.0, %v1797
        %v1799 = vpop.f32.mrb[0].mxu0
        %1800 = vdwg.mxu0
        %v1801 = vadd.f32 %v1594, %v1672
        %v1802 = vadd.f32 %v1595, %v1675
        %v1803 = vadd.f32 %v1596, %v1713
        %v1804 = vadd.f32 %v1597, %v1716
        %v1805 = vadd.f32 %v1598, %v1754
        %v1806 = vadd.f32 %v1599, %v1757
        %v1807 = vadd.f32 %v1600, %v1795
        %v1808 = vadd.f32 %v1601, %v1798
        %vm1809 = vcmask 261120
        %1810 = vst.msk [vmem:[#allocation2] sm:$0xff] %vm1809, %v1801
        %1811 = vst.msk [vmem:[#allocation2 + $0x8] sm:$0xff] %vm1809, %v1802
        %1812 = vst.msk [vmem:[#allocation2 + $0x10] sm:$0xff] %vm1809, %v1803
        %1813 = vst.msk [vmem:[#allocation2 + $0x18] sm:$0xff] %vm1809, %v1804
        %1814 = vst.msk [vmem:[#allocation2 + $0x20] sm:$0xff] %vm1809, %v1805
        %1815 = vst.msk [vmem:[#allocation2 + $0x28] sm:$0xff] %vm1809, %v1806
        %1816 = vst.msk [vmem:[#allocation2 + $0x30] sm:$0xff] %vm1809, %v1807
        %1817 = vst.msk [vmem:[#allocation2 + $0x38] sm:$0xff] %vm1809, %v1808
        %p1818 = scmp.eq.s32.totalorder %s24, 1
        // Predicated region
        $region155: #{tpu_custom_call.1} parent=133 // pred_check
          %p1819 = pneg %p1818
        $region156: #{tpu_custom_call.1} parent=133 // pred_check_branch
          %1821 = sbr.rel (%p1819) target = $region158
        $region157: #{tpu_custom_call.1} parent=133 // pred_region
          %v1822 = vld [vmem:[#allocation2] sm:$0xff]
          %v1823 = vld [vmem:[#allocation2 + $0x8] sm:$0xff]
          %v1824 = vld [vmem:[#allocation2 + $0x10] sm:$0xff]
          %v1825 = vld [vmem:[#allocation2 + $0x18] sm:$0xff]
          %v1826 = vld [vmem:[#allocation2 + $0x20] sm:$0xff]
          %v1827 = vld [vmem:[#allocation2 + $0x28] sm:$0xff]
          %v1828 = vld [vmem:[#allocation2 + $0x30] sm:$0xff]
          %v1829 = vld [vmem:[#allocation2 + $0x38] sm:$0xff]
          %1830 = vst.msk [vmem:[%s892] sm:$0xff] %vm1809, %v1822
          %1831 = vst.msk [vmem:[%s892 + $0x8] sm:$0xff] %vm1809, %v1823
          %1832 = vst.msk [vmem:[%s892 + $0x10] sm:$0xff] %vm1809, %v1824
          %1833 = vst.msk [vmem:[%s892 + $0x18] sm:$0xff] %vm1809, %v1825
          %1834 = vst.msk [vmem:[%s892 + $0x20] sm:$0xff] %vm1809, %v1826
          %1835 = vst.msk [vmem:[%s892 + $0x28] sm:$0xff] %vm1809, %v1827
          %1836 = vst.msk [vmem:[%s892 + $0x30] sm:$0xff] %vm1809, %v1828
          %1837 = vst.msk [vmem:[%s892 + $0x38] sm:$0xff] %vm1809, %v1829
        $region158: #{tpu_custom_call.1} parent=133 // pred_fallthru
          _
        %s1838 = sand.u32 %s138, 1
        %s1839 = scalar_lea.sflag [#allocation8], %s1838
        %s1840 = sand.u32 %s138, 1
        %s1841 = smul.addr %s1840, 64
        %s1842 = scalar_lea.vmem [#allocation7], %s1841
        // Predicated region
        $region159: #{tpu_custom_call.1} parent=133 // pred_check
          %p1843 = pneg %p148
        $region160: #{tpu_custom_call.1} parent=133 // pred_check_branch
          %1845 = sbr.rel (%p1843) target = $region162
        $region161: #{tpu_custom_call.1} parent=133 // pred_region
          #allocation10 [shape = 'u32[6]{0}', space=smem, size = 0x18, scoped, tag = 'DMA stride descriptor']
          %s1846 = smul.u32 4, %s22
          %s1847 = smul.u32 2, %s23
          %s1849 = ssub.s32 1024, 1024
          %1850 = vsyncadd %s1839, %s1849
          %s1851 = smul.addr %s1846, 4
          %s1852 = sadd.s32 %s1847, %s1851
          %s1853 = smul.addr %s1852, 128
          %s1854 = scalar_lea.hbm %s3, %s1853
          %s1856 = sshll.u32 1, 14
          %s1857 = sxor.u32 4294967295, %s1856
          %s1860 = sshll.u32 7, 18
          %s1861 = sxor.u32 4294967295, %s1860
          %s1862 = sand.u32 0, %s1861
          %s1864 = sor.u32 %s1862, 0
          %s1866 = sshll.u32 3, 24
          %s1867 = sxor.u32 4294967295, %s1866
          %s1868 = sand.u32 %s1864, %s1867
          %s1870 = sor.u32 %s1868, 0
          %s1871 = sshll.u32 %s1842, 4
          %s1872 = int_to_ptr.vmem [resolvable:$true] %s1871
          %1878 = sst [smem:[#allocation10]] 256
          %s1879 = scalar_lea.smem [#allocation10], 1
          %1880 = sst [smem:[%s1879]] 512
          %s1881 = scalar_lea.smem [#allocation10], 2
          %1882 = sst [smem:[%s1881]] 2
          %s1883 = scalar_lea.smem [#allocation10], 3
          %1884 = sst [smem:[%s1883]] 128
          %s1885 = scalar_lea.smem [#allocation10], 4
          %1886 = sst [smem:[%s1885]] 128
          %s1887 = scalar_lea.smem [#allocation10], 5
          %1888 = sst [smem:[%s1887]] 8
          %1890 = dma.general %s1872, 1024, %s1854, %s1839, [#allocation9], [#allocation10], %s1870, 0
        $region162: #{tpu_custom_call.1} parent=133 // pred_fallthru
          _
      $region134: #{tpu_custom_call.1} parent=5 // pred_fallthru
        _
      %p1891 = scmp.le.s32.totalorder 2, %s12
      // Predicated region
      $region163: #{tpu_custom_call.1} parent=5 // pred_check
        %p1892 = pneg %p1891
      $region164: #{tpu_custom_call.1} parent=5 // pred_check_branch
        %1894 = sbr.rel (%p1892) target = $region166
      $region165: #{tpu_custom_call.1} parent=5 // pred_region
        %s1895 = ssub.s32 %s12, 2
        // Predicated region
        $region167: #{tpu_custom_call.1} parent=165 // pred_check
          %p1896 = pneg %p154
        $region168: #{tpu_custom_call.1} parent=165 // pred_check_branch
          %1898 = sbr.rel (%p1896) target = $region170
        $region169: #{tpu_custom_call.1} parent=165 // pred_region
          %s1899 = sand.u32 %s139, 1
          %s1900 = scalar_lea.sflag [#allocation8], %s1899
          %s1901 = sand.u32 %s139, 1
          %s1902 = smul.addr %s1901, 64
          %s1903 = scalar_lea.vmem [#allocation7], %s1902
          %1904 = dma.done %s1900, 1024
        $region170: #{tpu_custom_call.1} parent=165 // pred_fallthru
          _
      $region166: #{tpu_custom_call.1} parent=5 // pred_fallthru
        _
    $region6: #{tpu_custom_call.1} parent=1 // loop_footer
      %s16 = sadd.s32 1, %s12
    $region7: #{tpu_custom_call.1} parent=1 // loop_footer_branch
      %11 = sbr.rel target = $region3
    $region8: #{tpu_custom_call.1} parent=1 // loop_exit
      _
    %1905 = vsyncpa [#allocation8], 1
    %s1906 = scalar_lea.sflag [#allocation8], 1
    %1907 = vsyncpa %s1906, 1

</llo_original>
